<compile_context>
chip_gen: v5e
topology: v5e:2x2
jax: 0.10.0
libtpu: 0.0.40
codegen_flags: <defaults>
</compile_context>

<pallas_src>
import functools
import math

import jax
import jax.numpy as jnp
from jax.experimental import pallas as pl
from jax.experimental.pallas import tpu as pltpu


# --------------------------- kernel ---------------------------

def _encoder_kernel(
    x_ref,
    wqkv_ref, bqkv_ref,
    wo_ref, bo_ref,
    g1_ref, be1_ref,
    w1_ref, b1_ref,
    w2_ref, b2_ref,
    g2_ref, be2_ref,
    out_ref,
    act_ref,
    *, num_heads):
  """One Transformer layer for one batch tile; grid = (batch_tile, layer)."""
  layer = pl.program_id(1)
  TB, S, E = x_ref.shape
  D = E // num_heads
  M = TB * S

  # Load this batch tile into the persistent f32 activation scratch at layer 0.
  @pl.when(layer == 0)
  def _():
    act_ref[...] = x_ref[...].reshape(M, E).astype(jnp.float32)

  x2 = act_ref[...]                                     # (M, E) f32
  x_bf = x2.astype(jnp.bfloat16)

  # ---- fused (block-diagonal) QKV projection: one bf16 MXU matmul ----
  # 1/sqrt(D) is already folded into the Q weights/bias.
  qkv = jnp.dot(x_bf, wqkv_ref[0],
                preferred_element_type=jnp.float32) + bqkv_ref[0]   # (M, 3E) f32
  qkv_bf = qkv.astype(jnp.bfloat16)

  # ---- multi-head attention (heads share the same projections) ----
  ctx_heads = []
  for h in range(num_heads):                            # small static unroll
    qh = qkv_bf[:, h * D:(h + 1) * D].reshape(TB, S, D)
    kh = qkv_bf[:, E + h * D:E + (h + 1) * D].reshape(TB, S, D)
    vh = qkv_bf[:, 2 * E + h * D:2 * E + (h + 1) * D].reshape(TB, S, D)

    s = jnp.einsum('bsd,btd->bst', qh, kh,
                   preferred_element_type=jnp.float32)              # (TB, S, S)
    s = s - jnp.max(s, axis=-1, keepdims=True)
    p = jnp.exp(s)
    p = p * pl.reciprocal(jnp.sum(p, axis=-1, keepdims=True), approx=True)
    ctx = jnp.einsum('bst,btd->bsd', p.astype(jnp.bfloat16), vh,
                     preferred_element_type=jnp.float32)            # (TB, S, D)
    ctx_heads.append(ctx.astype(jnp.bfloat16))

  # Head concat (matches torch .transpose(1,2).view(...)) + single full-E
  # contraction output projection on the MXU.
  concat = jnp.concatenate(ctx_heads, axis=-1).reshape(M, E)        # (M, E) bf16
  attn = jnp.dot(concat, wo_ref[0],
                 preferred_element_type=jnp.float32) + bo_ref[0]    # (M, E) f32

  # residual with v (== x)
  res1 = attn + x2

  # LayerNorm 1 (eps=1e-5, biased variance, single pass, f32)
  mean1 = jnp.mean(res1, axis=-1, keepdims=True)
  var1 = jnp.mean(res1 * res1, axis=-1, keepdims=True) - mean1 * mean1
  n1 = (res1 - mean1) * jax.lax.rsqrt(var1 + 1e-5) * g1_ref[0] + be1_ref[0]
  # TODO(synk): dropout_1 / dropout_2 are identity here (eval-mode semantics).

  # ---- feed-forward (bf16 MXU, f32 accumulation) ----
  h1 = jnp.dot(n1.astype(jnp.bfloat16), w1_ref[0],
               preferred_element_type=jnp.float32) + b1_ref[0]
  h1 = jnp.maximum(h1, 0.0)
  h2 = jnp.dot(h1.astype(jnp.bfloat16), w2_ref[0],
               preferred_element_type=jnp.float32) + b2_ref[0]

  # residual with the (dropped-out) norm-1 output
  res2 = h2 + n1

  # LayerNorm 2
  mean2 = jnp.mean(res2, axis=-1, keepdims=True)
  var2 = jnp.mean(res2 * res2, axis=-1, keepdims=True) - mean2 * mean2
  n2 = (res2 - mean2) * jax.lax.rsqrt(var2 + 1e-5) * g2_ref[0] + be2_ref[0]

  # feed the next layer (scratch persists across the layer grid axis)
  act_ref[...] = n2

  @pl.when(layer == pl.num_programs(1) - 1)
  def _():
    out_ref[...] = n2.reshape(TB, S, E).astype(out_ref.dtype)


# --------------------------- wrapper ---------------------------

def transformer_encoder_pallas(x, params, *, num_heads, tile_b=1):
  B, S, E = x.shape
  (wqkv, bqkv, wo, bo, g1, be1, w1, b1, w2, b2, g2, be2) = params
  L = wqkv.shape[0]
  F = w1.shape[-1]
  assert B % tile_b == 0, "batch must be divisible by tile_b"

  grid = (B // tile_b, L)          # (batch tiles [parallel], layers [arbitrary])

  def act_map(b, l):               # activation / output: per batch tile
    return (b, 0, 0)

  def layer_map(b, l):             # per-layer weights: prefetch along layer axis
    return (l, 0, 0)

  in_specs = [
      pl.BlockSpec((tile_b, S, E), act_map),      # x
      pl.BlockSpec((1, E, 3 * E), layer_map),     # wqkv (bf16)
      pl.BlockSpec((1, 1, 3 * E), layer_map),     # bqkv
      pl.BlockSpec((1, E, E), layer_map),         # wo (bf16)
      pl.BlockSpec((1, 1, E), layer_map),         # bo
      pl.BlockSpec((1, 1, E), layer_map),         # gamma1
      pl.BlockSpec((1, 1, E), layer_map),         # beta1
      pl.BlockSpec((1, E, F), layer_map),         # w1 (bf16)
      pl.BlockSpec((1, 1, F), layer_map),         # b1
      pl.BlockSpec((1, F, E), layer_map),         # w2 (bf16)
      pl.BlockSpec((1, 1, E), layer_map),         # b2
      pl.BlockSpec((1, 1, E), layer_map),         # gamma2
      pl.BlockSpec((1, 1, E), layer_map),         # beta2
  ]
  out_specs = pl.BlockSpec((tile_b, S, E), act_map)

  kernel = functools.partial(_encoder_kernel, num_heads=num_heads)
  return pl.pallas_call(
      kernel,
      out_shape=jax.ShapeDtypeStruct((B, S, E), x.dtype),
      grid_spec=pltpu.PrefetchScalarGridSpec(
          num_scalar_prefetch=0,
          grid=grid,
          in_specs=in_specs,
          out_specs=out_specs,
          scratch_shapes=[pltpu.VMEM((tile_b * S, E), jnp.float32)],
      ),
      compiler_params=pltpu.CompilerParams(
          dimension_semantics=("parallel", "arbitrary"),
          vmem_limit_bytes=48 * 1024 * 1024,
      ),
  )(x, wqkv, bqkv, wo, bo, g1, be1, w1, b1, w2, b2, g2, be2)


@functools.partial(jax.jit, static_argnames=("num_heads", "tile_b"))
def transformer_encoder(x, params, *, num_heads, tile_b=1):
  return transformer_encoder_pallas(x, params, num_heads=num_heads, tile_b=tile_b)


# ---------------- parameter init, packing and pure-JAX reference ----------------

def _init_linear(key, in_dim, out_dim):
  """PyTorch nn.Linear-style init; weight stored as (in, out)."""
  kw, kb = jax.random.split(key)
  bound = 1.0 / math.sqrt(in_dim)
  w = jax.random.uniform(kw, (in_dim, out_dim), jnp.float32, -bound, bound)
  b = jax.random.uniform(kb, (out_dim,), jnp.float32, -bound, bound)
  return w, b


def init_raw_params(key, emb_dim, num_heads, expansion_factor, layers):
  D = emb_dim // num_heads
  raw = []
  for lk in jax.random.split(key, layers):
    keys = jax.random.split(lk, 6)
    wq, bq = _init_linear(keys[0], D, D)
    wk, bk = _init_linear(keys[1], D, D)
    wv, bv = _init_linear(keys[2], D, D)
    wo, bo = _init_linear(keys[3], emb_dim, emb_dim)
    w1, b1 = _init_linear(keys[4], emb_dim, expansion_factor * emb_dim)
    w2, b2 = _init_linear(keys[5], expansion_factor * emb_dim, emb_dim)
    raw.append(dict(
        wq=wq, bq=bq, wk=wk, bk=bk, wv=wv, bv=bv, wo=wo, bo=bo,
        w1=w1, b1=b1, w2=w2, b2=b2,
        g1=jnp.ones((emb_dim,), jnp.float32), be1=jnp.zeros((emb_dim,), jnp.float32),
        g2=jnp.ones((emb_dim,), jnp.float32), be2=jnp.zeros((emb_dim,), jnp.float32)))
  return raw


def _block_diag(w, num_heads):
  """Expand a shared (D, Do) head weight into a block-diagonal (H*D, H*Do)."""
  d_in, d_out = w.shape
  eye = jnp.eye(num_heads, dtype=w.dtype)
  return (eye[:, None, :, None] * w[None, :, None, :]).reshape(
      num_heads * d_in, num_heads * d_out)


def pack_params(raw, num_heads):
  """Pack raw per-layer params into the stacked, kernel-friendly layout."""
  emb_dim = raw[0]["wo"].shape[0]
  D = emb_dim // num_heads
  scale = 1.0 / math.sqrt(D)
  per_layer = []
  for p in raw:
    # Fuse Q/K/V into one block-diagonal (E, 3E) weight; fold 1/sqrt(D) into Q.
    wqkv = jnp.concatenate([_block_diag(p["wq"] * scale, num_heads),
                            _block_diag(p["wk"], num_heads),
                            _block_diag(p["wv"], num_heads)], axis=1)
    bqkv = jnp.concatenate([jnp.tile(p["bq"] * scale, num_heads),
                            jnp.tile(p["bk"], num_heads),
                            jnp.tile(p["bv"], num_heads)])
    per_layer.append(dict(
        wqkv=wqkv.astype(jnp.bfloat16), bqkv=bqkv.reshape(1, -1),
        wo=p["wo"].astype(jnp.bfloat16), bo=p["bo"].reshape(1, -1),
        g1=p["g1"].reshape(1, -1), be1=p["be1"].reshape(1, -1),
        w1=p["w1"].astype(jnp.bfloat16), b1=p["b1"].reshape(1, -1),
        w2=p["w2"].astype(jnp.bfloat16), b2=p["b2"].reshape(1, -1),
        g2=p["g2"].reshape(1, -1), be2=p["be2"].reshape(1, -1)))
  names = ("wqkv", "bqkv", "wo", "bo", "g1", "be1",
           "w1", "b1", "w2", "b2", "g2", "be2")
  return tuple(jnp.stack([pl_[n] for pl_ in per_layer], axis=0) for n in names)


def _layernorm(x, g, b, eps=1e-5):
  m = jnp.mean(x, axis=-1, keepdims=True)
  v = jnp.mean((x - m) ** 2, axis=-1, keepdims=True)
  return (x - m) * jax.lax.rsqrt(v + eps) * g + b


def reference_forward(x, raw, num_heads):
  """Pure-JAX f32 replica of TransformerEncoder.forward (eval mode)."""
  B, S, E = x.shape
  D = E // num_heads
  scale = 1.0 / math.sqrt(D)
  for p in raw:
    xh = x.reshape(B, S, num_heads, D)
    q = xh @ p["wq"] + p["bq"]
    k = xh @ p["wk"] + p["bk"]
    v = xh @ p["wv"] + p["bv"]
    q, k, v = (jnp.transpose(t, (0, 2, 1, 3)) for t in (q, k, v))
    s = jnp.einsum("bhsd,bhtd->bhst", q, k) * scale
    att = jax.nn.softmax(s, axis=-1)
    ctx = jnp.einsum("bhst,bhtd->bhsd", att, v)
    concat = jnp.transpose(ctx, (0, 2, 1, 3)).reshape(B, S, E)
    attn = concat @ p["wo"] + p["bo"]
    n1 = _layernorm(attn + x, p["g1"], p["be1"])
    h1 = jax.nn.relu(n1 @ p["w1"] + p["b1"])
    h2 = h1 @ p["w2"] + p["b2"]
    x = _layernorm(h2 + n1, p["g2"], p["be2"])
  return x


if __name__ == "__main__":
  # Shapes consistent with TransformerEncoder(seq_len, emb_dim, layers,
  # batch_size, num_heads, expansion_factor=4)
  BATCH, SEQ_LEN, EMB_DIM, NUM_HEADS, LAYERS, EXPANSION = 2, 8, 32, 4, 2, 4

  key = jax.random.PRNGKey(0)
  kx, kp = jax.random.split(key)
  x = jax.random.normal(kx, (BATCH, SEQ_LEN, EMB_DIM), jnp.float32)

  raw = init_raw_params(kp, EMB_DIM, NUM_HEADS, EXPANSION, LAYERS)
  params = pack_params(raw, NUM_HEADS)

  out = transformer_encoder(x, params, num_heads=NUM_HEADS, tile_b=1)
  jax.block_until_ready(out)

  assert out.shape == (BATCH, SEQ_LEN, EMB_DIM)
  assert bool(jnp.all(jnp.isfinite(out)))

  ref = reference_forward(x, raw, NUM_HEADS)
  max_err = float(jnp.max(jnp.abs(out.astype(jnp.float32) - ref)))
  assert max_err < 0.3, f"mismatch vs f32 reference: max abs err {max_err}"
  print("KERNEL_OK")
</pallas_src>

<mosaic_0001>
module attributes {stable_mosaic.version = 11 : i64} {
  func.func @_encoder_kernel(%arg0: i32, %arg1: i32, %arg2: memref<1x8x32xf32, #tpu.memory_space<vmem>>, %arg3: memref<1x32x96xbf16, #tpu.memory_space<vmem>>, %arg4: memref<1x1x96xf32, #tpu.memory_space<vmem>>, %arg5: memref<1x32x32xbf16, #tpu.memory_space<vmem>>, %arg6: memref<1x1x32xf32, #tpu.memory_space<vmem>>, %arg7: memref<1x1x32xf32, #tpu.memory_space<vmem>>, %arg8: memref<1x1x32xf32, #tpu.memory_space<vmem>>, %arg9: memref<1x32x128xbf16, #tpu.memory_space<vmem>>, %arg10: memref<1x1x128xf32, #tpu.memory_space<vmem>>, %arg11: memref<1x128x32xbf16, #tpu.memory_space<vmem>>, %arg12: memref<1x1x32xf32, #tpu.memory_space<vmem>>, %arg13: memref<1x1x32xf32, #tpu.memory_space<vmem>>, %arg14: memref<1x1x32xf32, #tpu.memory_space<vmem>>, %arg15: memref<1x8x32xf32, #tpu.memory_space<vmem>>, %arg16: memref<8x32xf32, #tpu.memory_space<vmem>>) attributes {dimension_semantics = [#tpu.dimension_semantics<parallel>, #tpu.dimension_semantics<arbitrary>], iteration_bounds = array<i64: 2, 2>, scalar_prefetch = 0 : i64, scratch_operands = 1 : i64, tpu.core_type = #tpu.core_type<tc>, window_params = [{transform_indices = @transform_0, window_bounds = array<i64: 1, 8, 32>}, {transform_indices = @transform_1, window_bounds = array<i64: 1, 32, 96>}, {transform_indices = @transform_2, window_bounds = array<i64: 1, 1, 96>}, {transform_indices = @transform_3, window_bounds = array<i64: 1, 32, 32>}, {transform_indices = @transform_4, window_bounds = array<i64: 1, 1, 32>}, {transform_indices = @transform_5, window_bounds = array<i64: 1, 1, 32>}, {transform_indices = @transform_6, window_bounds = array<i64: 1, 1, 32>}, {transform_indices = @transform_7, window_bounds = array<i64: 1, 32, 128>}, {transform_indices = @transform_8, window_bounds = array<i64: 1, 1, 128>}, {transform_indices = @transform_9, window_bounds = array<i64: 1, 128, 32>}, {transform_indices = @transform_10, window_bounds = array<i64: 1, 1, 32>}, {transform_indices = @transform_11, window_bounds = array<i64: 1, 1, 32>}, {transform_indices = @transform_12, window_bounds = array<i64: 1, 1, 32>}, {transform_indices = @transform_13, window_bounds = array<i64: 1, 8, 32>}]} {
    %c0_i32 = arith.constant 0 : i32
    %0 = arith.cmpi eq, %arg1, %c0_i32 : i32
    %1 = arith.extui %0 : i1 to i32
    %c0_i32_0 = arith.constant 0 : i32
    %2 = arith.cmpi ne, %1, %c0_i32_0 : i32
    scf.if %2 {
      %c0_71 = arith.constant 0 : index
      %c0_72 = arith.constant 0 : index
      %c0_73 = arith.constant 0 : index
      %178 = vector.load %arg2[%c0_71, %c0_72, %c0_73] : memref<1x8x32xf32, #tpu.memory_space<vmem>>, vector<1x8x32xf32>
      %179 = vector.shape_cast %178 : vector<1x8x32xf32> to vector<8x32xf32>
      %c0_74 = arith.constant 0 : index
      %c0_75 = arith.constant 0 : index
      %180 = vector.load %arg16[%c0_74, %c0_75] : memref<8x32xf32, #tpu.memory_space<vmem>>, vector<8x32xf32>
      tpu.vector_store %arg16[%c0_74, %c0_75], %179 {strides = array<i32>} : memref<8x32xf32, #tpu.memory_space<vmem>>, vector<8x32xf32>,
    } else {
    }
    %c0 = arith.constant 0 : index
    %c0_1 = arith.constant 0 : index
    %3 = vector.load %arg16[%c0, %c0_1] : memref<8x32xf32, #tpu.memory_space<vmem>>, vector<8x32xf32>
    %4 = arith.truncf %3 : vector<8x32xf32> to vector<8x32xbf16>
    %c0_2 = arith.constant 0 : index
    %c0_3 = arith.constant 0 : index
    %c0_4 = arith.constant 0 : index
    %5 = vector.load %arg3[%c0_2, %c0_3, %c0_4] : memref<1x32x96xbf16, #tpu.memory_space<vmem>>, vector<1x32x96xbf16>
    %6 = vector.shape_cast %5 : vector<1x32x96xbf16> to vector<32x96xbf16>
    %cst = arith.constant dense<0.000000e+00> : vector<8x96xf32>
    %7 = tpu.matmul %4, %6, %cst {dimension_numbers = #tpu.dot_dimension_numbers<[1], [0], [0], [1], [0, 0, 1, 1], [], []>} : vector<8x32xbf16>, vector<32x96xbf16>, vector<8x96xf32> -> vector<8x96xf32>
    %c0_5 = arith.constant 0 : index
    %c0_6 = arith.constant 0 : index
    %c0_7 = arith.constant 0 : index
    %8 = vector.load %arg4[%c0_5, %c0_6, %c0_7] : memref<1x1x96xf32, #tpu.memory_space<vmem>>, vector<1x1x96xf32>
    %9 = vector.shape_cast %8 : vector<1x1x96xf32> to vector<1x96xf32>
    %10 = vector.broadcast %9 : vector<1x96xf32> to vector<8x96xf32>
    %11 = arith.addf %7, %10 : vector<8x96xf32>
    %12 = arith.truncf %11 : vector<8x96xf32> to vector<8x96xbf16>
    %13 = vector.extract_strided_slice %12 {offsets = [0, 0], sizes = [8, 8], strides = [1, 1]} : vector<8x96xbf16> to vector<8x8xbf16>
    %14 = vector.shape_cast %13 : vector<8x8xbf16> to vector<1x8x8xbf16>
    %15 = vector.extract_strided_slice %12 {offsets = [0, 32], sizes = [8, 8], strides = [1, 1]} : vector<8x96xbf16> to vector<8x8xbf16>
    %16 = vector.shape_cast %15 : vector<8x8xbf16> to vector<1x8x8xbf16>
    %17 = vector.extract_strided_slice %12 {offsets = [0, 64], sizes = [8, 8], strides = [1, 1]} : vector<8x96xbf16> to vector<8x8xbf16>
    %18 = vector.shape_cast %17 : vector<8x8xbf16> to vector<1x8x8xbf16>
    "tpu.trace_start"() <{level = 10 : i32, message = "bsd,btd->bst"}> : () -> ()
    %cst_8 = arith.constant dense<0.000000e+00> : vector<1x8x8xf32>
    %19 = tpu.matmul %14, %16, %cst_8 {dimension_numbers = #tpu.dot_dimension_numbers<[2], [2], [1], [1], [0, 0, 0, 1, 1, 1], [0], [0]>} : vector<1x8x8xbf16>, vector<1x8x8xbf16>, vector<1x8x8xf32> -> vector<1x8x8xf32>
    "tpu.trace_stop"() : () -> ()
    %cst_9 = arith.constant dense<0xFF800000> : vector<1x8xf32>
    %20 = vector.multi_reduction <maximumf>, %19, %cst_9 [2] : vector<1x8x8xf32> to vector<1x8xf32>
    %21 = vector.shape_cast %20 : vector<1x8xf32> to vector<1x8x1xf32>
    %22 = vector.broadcast %21 : vector<1x8x1xf32> to vector<1x8x8xf32>
    %23 = arith.subf %19, %22 : vector<1x8x8xf32>
    %24 = math.exp %23 : vector<1x8x8xf32>
    %cst_10 = arith.constant dense<0.000000e+00> : vector<1x8xf32>
    %25 = vector.multi_reduction <add>, %24, %cst_10 [2] : vector<1x8x8xf32> to vector<1x8xf32>
    %26 = vector.shape_cast %25 : vector<1x8xf32> to vector<1x8x1xf32>
    %27 = tpu.reciprocal %26 {approx = true} : vector<1x8x1xf32> -> vector<1x8x1xf32>
    %28 = vector.broadcast %27 : vector<1x8x1xf32> to vector<1x8x8xf32>
    %29 = arith.mulf %24, %28 : vector<1x8x8xf32>
    %30 = arith.truncf %29 : vector<1x8x8xf32> to vector<1x8x8xbf16>
    "tpu.trace_start"() <{level = 10 : i32, message = "bst,btd->bsd"}> : () -> ()
    %cst_11 = arith.constant dense<0.000000e+00> : vector<1x8x8xf32>
    %31 = tpu.matmul %30, %18, %cst_11 {dimension_numbers = #tpu.dot_dimension_numbers<[2], [1], [1], [2], [0, 0, 0, 1, 1, 2], [0], [0]>} : vector<1x8x8xbf16>, vector<1x8x8xbf16>, vector<1x8x8xf32> -> vector<1x8x8xf32>
    "tpu.trace_stop"() : () -> ()
    %32 = arith.truncf %31 : vector<1x8x8xf32> to vector<1x8x8xbf16>
    %33 = vector.extract_strided_slice %12 {offsets = [0, 8], sizes = [8, 8], strides = [1, 1]} : vector<8x96xbf16> to vector<8x8xbf16>
    %34 = vector.shape_cast %33 : vector<8x8xbf16> to vector<1x8x8xbf16>
    %35 = vector.extract_strided_slice %12 {offsets = [0, 40], sizes = [8, 8], strides = [1, 1]} : vector<8x96xbf16> to vector<8x8xbf16>
    %36 = vector.shape_cast %35 : vector<8x8xbf16> to vector<1x8x8xbf16>
    %37 = vector.extract_strided_slice %12 {offsets = [0, 72], sizes = [8, 8], strides = [1, 1]} : vector<8x96xbf16> to vector<8x8xbf16>
    %38 = vector.shape_cast %37 : vector<8x8xbf16> to vector<1x8x8xbf16>
    "tpu.trace_start"() <{level = 10 : i32, message = "bsd,btd->bst"}> : () -> ()
    %cst_12 = arith.constant dense<0.000000e+00> : vector<1x8x8xf32>
    %39 = tpu.matmul %34, %36, %cst_12 {dimension_numbers = #tpu.dot_dimension_numbers<[2], [2], [1], [1], [0, 0, 0, 1, 1, 1], [0], [0]>} : vector<1x8x8xbf16>, vector<1x8x8xbf16>, vector<1x8x8xf32> -> vector<1x8x8xf32>
    "tpu.trace_stop"() : () -> ()
    %cst_13 = arith.constant dense<0xFF800000> : vector<1x8xf32>
    %40 = vector.multi_reduction <maximumf>, %39, %cst_13 [2] : vector<1x8x8xf32> to vector<1x8xf32>
    %41 = vector.shape_cast %40 : vector<1x8xf32> to vector<1x8x1xf32>
    %42 = vector.broadcast %41 : vector<1x8x1xf32> to vector<1x8x8xf32>
    %43 = arith.subf %39, %42 : vector<1x8x8xf32>
    %44 = math.exp %43 : vector<1x8x8xf32>
    %cst_14 = arith.constant dense<0.000000e+00> : vector<1x8xf32>
    %45 = vector.multi_reduction <add>, %44, %cst_14 [2] : vector<1x8x8xf32> to vector<1x8xf32>
    %46 = vector.shape_cast %45 : vector<1x8xf32> to vector<1x8x1xf32>
    %47 = tpu.reciprocal %46 {approx = true} : vector<1x8x1xf32> -> vector<1x8x1xf32>
    %48 = vector.broadcast %47 : vector<1x8x1xf32> to vector<1x8x8xf32>
    %49 = arith.mulf %44, %48 : vector<1x8x8xf32>
    %50 = arith.truncf %49 : vector<1x8x8xf32> to vector<1x8x8xbf16>
    "tpu.trace_start"() <{level = 10 : i32, message = "bst,btd->bsd"}> : () -> ()
    %cst_15 = arith.constant dense<0.000000e+00> : vector<1x8x8xf32>
    %51 = tpu.matmul %50, %38, %cst_15 {dimension_numbers = #tpu.dot_dimension_numbers<[2], [1], [1], [2], [0, 0, 0, 1, 1, 2], [0], [0]>} : vector<1x8x8xbf16>, vector<1x8x8xbf16>, vector<1x8x8xf32> -> vector<1x8x8xf32>
    "tpu.trace_stop"() : () -> ()
    %52 = arith.truncf %51 : vector<1x8x8xf32> to vector<1x8x8xbf16>
    %53 = vector.extract_strided_slice %12 {offsets = [0, 16], sizes = [8, 8], strides = [1, 1]} : vector<8x96xbf16> to vector<8x8xbf16>
    %54 = vector.shape_cast %53 : vector<8x8xbf16> to vector<1x8x8xbf16>
    %55 = vector.extract_strided_slice %12 {offsets = [0, 48], sizes = [8, 8], strides = [1, 1]} : vector<8x96xbf16> to vector<8x8xbf16>
    %56 = vector.shape_cast %55 : vector<8x8xbf16> to vector<1x8x8xbf16>
    %57 = vector.extract_strided_slice %12 {offsets = [0, 80], sizes = [8, 8], strides = [1, 1]} : vector<8x96xbf16> to vector<8x8xbf16>
    %58 = vector.shape_cast %57 : vector<8x8xbf16> to vector<1x8x8xbf16>
    "tpu.trace_start"() <{level = 10 : i32, message = "bsd,btd->bst"}> : () -> ()
    %cst_16 = arith.constant dense<0.000000e+00> : vector<1x8x8xf32>
    %59 = tpu.matmul %54, %56, %cst_16 {dimension_numbers = #tpu.dot_dimension_numbers<[2], [2], [1], [1], [0, 0, 0, 1, 1, 1], [0], [0]>} : vector<1x8x8xbf16>, vector<1x8x8xbf16>, vector<1x8x8xf32> -> vector<1x8x8xf32>
    "tpu.trace_stop"() : () -> ()
    %cst_17 = arith.constant dense<0xFF800000> : vector<1x8xf32>
    %60 = vector.multi_reduction <maximumf>, %59, %cst_17 [2] : vector<1x8x8xf32> to vector<1x8xf32>
    %61 = vector.shape_cast %60 : vector<1x8xf32> to vector<1x8x1xf32>
    %62 = vector.broadcast %61 : vector<1x8x1xf32> to vector<1x8x8xf32>
    %63 = arith.subf %59, %62 : vector<1x8x8xf32>
    %64 = math.exp %63 : vector<1x8x8xf32>
    %cst_18 = arith.constant dense<0.000000e+00> : vector<1x8xf32>
    %65 = vector.multi_reduction <add>, %64, %cst_18 [2] : vector<1x8x8xf32> to vector<1x8xf32>
    %66 = vector.shape_cast %65 : vector<1x8xf32> to vector<1x8x1xf32>
    %67 = tpu.reciprocal %66 {approx = true} : vector<1x8x1xf32> -> vector<1x8x1xf32>
    %68 = vector.broadcast %67 : vector<1x8x1xf32> to vector<1x8x8xf32>
    %69 = arith.mulf %64, %68 : vector<1x8x8xf32>
    %70 = arith.truncf %69 : vector<1x8x8xf32> to vector<1x8x8xbf16>
    "tpu.trace_start"() <{level = 10 : i32, message = "bst,btd->bsd"}> : () -> ()
    %cst_19 = arith.constant dense<0.000000e+00> : vector<1x8x8xf32>
    %71 = tpu.matmul %70, %58, %cst_19 {dimension_numbers = #tpu.dot_dimension_numbers<[2], [1], [1], [2], [0, 0, 0, 1, 1, 2], [0], [0]>} : vector<1x8x8xbf16>, vector<1x8x8xbf16>, vector<1x8x8xf32> -> vector<1x8x8xf32>
    "tpu.trace_stop"() : () -> ()
    %72 = arith.truncf %71 : vector<1x8x8xf32> to vector<1x8x8xbf16>
    %73 = vector.extract_strided_slice %12 {offsets = [0, 24], sizes = [8, 8], strides = [1, 1]} : vector<8x96xbf16> to vector<8x8xbf16>
    %74 = vector.shape_cast %73 : vector<8x8xbf16> to vector<1x8x8xbf16>
    %75 = vector.extract_strided_slice %12 {offsets = [0, 56], sizes = [8, 8], strides = [1, 1]} : vector<8x96xbf16> to vector<8x8xbf16>
    %76 = vector.shape_cast %75 : vector<8x8xbf16> to vector<1x8x8xbf16>
    %77 = vector.extract_strided_slice %12 {offsets = [0, 88], sizes = [8, 8], strides = [1, 1]} : vector<8x96xbf16> to vector<8x8xbf16>
    %78 = vector.shape_cast %77 : vector<8x8xbf16> to vector<1x8x8xbf16>
    "tpu.trace_start"() <{level = 10 : i32, message = "bsd,btd->bst"}> : () -> ()
    %cst_20 = arith.constant dense<0.000000e+00> : vector<1x8x8xf32>
    %79 = tpu.matmul %74, %76, %cst_20 {dimension_numbers = #tpu.dot_dimension_numbers<[2], [2], [1], [1], [0, 0, 0, 1, 1, 1], [0], [0]>} : vector<1x8x8xbf16>, vector<1x8x8xbf16>, vector<1x8x8xf32> -> vector<1x8x8xf32>
    "tpu.trace_stop"() : () -> ()
    %cst_21 = arith.constant dense<0xFF800000> : vector<1x8xf32>
    %80 = vector.multi_reduction <maximumf>, %79, %cst_21 [2] : vector<1x8x8xf32> to vector<1x8xf32>
    %81 = vector.shape_cast %80 : vector<1x8xf32> to vector<1x8x1xf32>
    %82 = vector.broadcast %81 : vector<1x8x1xf32> to vector<1x8x8xf32>
    %83 = arith.subf %79, %82 : vector<1x8x8xf32>
    %84 = math.exp %83 : vector<1x8x8xf32>
    %cst_22 = arith.constant dense<0.000000e+00> : vector<1x8xf32>
    %85 = vector.multi_reduction <add>, %84, %cst_22 [2] : vector<1x8x8xf32> to vector<1x8xf32>
    %86 = vector.shape_cast %85 : vector<1x8xf32> to vector<1x8x1xf32>
    %87 = tpu.reciprocal %86 {approx = true} : vector<1x8x1xf32> -> vector<1x8x1xf32>
    %88 = vector.broadcast %87 : vector<1x8x1xf32> to vector<1x8x8xf32>
    %89 = arith.mulf %84, %88 : vector<1x8x8xf32>
    %90 = arith.truncf %89 : vector<1x8x8xf32> to vector<1x8x8xbf16>
    "tpu.trace_start"() <{level = 10 : i32, message = "bst,btd->bsd"}> : () -> ()
    %cst_23 = arith.constant dense<0.000000e+00> : vector<1x8x8xf32>
    %91 = tpu.matmul %90, %78, %cst_23 {dimension_numbers = #tpu.dot_dimension_numbers<[2], [1], [1], [2], [0, 0, 0, 1, 1, 2], [0], [0]>} : vector<1x8x8xbf16>, vector<1x8x8xbf16>, vector<1x8x8xf32> -> vector<1x8x8xf32>
    "tpu.trace_stop"() : () -> ()
    %92 = arith.truncf %91 : vector<1x8x8xf32> to vector<1x8x8xbf16>
    %93 = tpu.concatenate %32, %52, %72, %92 in 2 : vector<1x8x8xbf16>, vector<1x8x8xbf16>, vector<1x8x8xbf16>, vector<1x8x8xbf16> -> vector<1x8x32xbf16>
    %94 = vector.shape_cast %93 : vector<1x8x32xbf16> to vector<8x32xbf16>
    %c0_24 = arith.constant 0 : index
    %c0_25 = arith.constant 0 : index
    %c0_26 = arith.constant 0 : index
    %95 = vector.load %arg5[%c0_24, %c0_25, %c0_26] : memref<1x32x32xbf16, #tpu.memory_space<vmem>>, vector<1x32x32xbf16>
    %96 = vector.shape_cast %95 : vector<1x32x32xbf16> to vector<32x32xbf16>
    %cst_27 = arith.constant dense<0.000000e+00> : vector<8x32xf32>
    %97 = tpu.matmul %94, %96, %cst_27 {dimension_numbers = #tpu.dot_dimension_numbers<[1], [0], [0], [1], [0, 0, 1, 1], [], []>} : vector<8x32xbf16>, vector<32x32xbf16>, vector<8x32xf32> -> vector<8x32xf32>
    %c0_28 = arith.constant 0 : index
    %c0_29 = arith.constant 0 : index
    %c0_30 = arith.constant 0 : index
    %98 = vector.load %arg6[%c0_28, %c0_29, %c0_30] : memref<1x1x32xf32, #tpu.memory_space<vmem>>, vector<1x1x32xf32>
    %99 = vector.shape_cast %98 : vector<1x1x32xf32> to vector<1x32xf32>
    %100 = vector.broadcast %99 : vector<1x32xf32> to vector<8x32xf32>
    %101 = arith.addf %97, %100 : vector<8x32xf32>
    %102 = arith.addf %101, %3 : vector<8x32xf32>
    %cst_31 = arith.constant dense<0.000000e+00> : vector<8xf32>
    %103 = vector.multi_reduction <add>, %102, %cst_31 [1] : vector<8x32xf32> to vector<8xf32>
    %104 = vector.shape_cast %103 : vector<8xf32> to vector<8x1xf32>
    %cst_32 = arith.constant 3.200000e+01 : f32
    %105 = vector.broadcast %cst_32 : f32 to vector<8x1xf32>
    %106 = arith.divf %104, %105 : vector<8x1xf32>
    %107 = arith.mulf %102, %102 : vector<8x32xf32>
    %cst_33 = arith.constant dense<0.000000e+00> : vector<8xf32>
    %108 = vector.multi_reduction <add>, %107, %cst_33 [1] : vector<8x32xf32> to vector<8xf32>
    %109 = vector.shape_cast %108 : vector<8xf32> to vector<8x1xf32>
    %cst_34 = arith.constant 3.200000e+01 : f32
    %110 = vector.broadcast %cst_34 : f32 to vector<8x1xf32>
    %111 = arith.divf %109, %110 : vector<8x1xf32>
    %112 = arith.mulf %106, %106 : vector<8x1xf32>
    %113 = arith.subf %111, %112 : vector<8x1xf32>
    %114 = vector.broadcast %106 : vector<8x1xf32> to vector<8x32xf32>
    %115 = arith.subf %102, %114 : vector<8x32xf32>
    %cst_35 = arith.constant 9.99999974E-6 : f32
    %116 = vector.broadcast %cst_35 : f32 to vector<8x1xf32>
    %117 = arith.addf %113, %116 : vector<8x1xf32>
    %118 = math.rsqrt %117 : vector<8x1xf32>
    %119 = vector.broadcast %118 : vector<8x1xf32> to vector<8x32xf32>
    %120 = arith.mulf %115, %119 : vector<8x32xf32>
    %c0_36 = arith.constant 0 : index
    %c0_37 = arith.constant 0 : index
    %c0_38 = arith.constant 0 : index
    %121 = vector.load %arg7[%c0_36, %c0_37, %c0_38] : memref<1x1x32xf32, #tpu.memory_space<vmem>>, vector<1x1x32xf32>
    %122 = vector.shape_cast %121 : vector<1x1x32xf32> to vector<1x32xf32>
    %123 = vector.broadcast %122 : vector<1x32xf32> to vector<8x32xf32>
    %124 = arith.mulf %120, %123 : vector<8x32xf32>
    %c0_39 = arith.constant 0 : index
    %c0_40 = arith.constant 0 : index
    %c0_41 = arith.constant 0 : index
    %125 = vector.load %arg8[%c0_39, %c0_40, %c0_41] : memref<1x1x32xf32, #tpu.memory_space<vmem>>, vector<1x1x32xf32>
    %126 = vector.shape_cast %125 : vector<1x1x32xf32> to vector<1x32xf32>
    %127 = vector.broadcast %126 : vector<1x32xf32> to vector<8x32xf32>
    %128 = arith.addf %124, %127 : vector<8x32xf32>
    %129 = arith.truncf %128 : vector<8x32xf32> to vector<8x32xbf16>
    %c0_42 = arith.constant 0 : index
    %c0_43 = arith.constant 0 : index
    %c0_44 = arith.constant 0 : index
    %130 = vector.load %arg9[%c0_42, %c0_43, %c0_44] : memref<1x32x128xbf16, #tpu.memory_space<vmem>>, vector<1x32x128xbf16>
    %131 = vector.shape_cast %130 : vector<1x32x128xbf16> to vector<32x128xbf16>
    %cst_45 = arith.constant dense<0.000000e+00> : vector<8x128xf32>
    %132 = tpu.matmul %129, %131, %cst_45 {dimension_numbers = #tpu.dot_dimension_numbers<[1], [0], [0], [1], [0, 0, 1, 1], [], []>} : vector<8x32xbf16>, vector<32x128xbf16>, vector<8x128xf32> -> vector<8x128xf32>
    %c0_46 = arith.constant 0 : index
    %c0_47 = arith.constant 0 : index
    %c0_48 = arith.constant 0 : index
    %133 = vector.load %arg10[%c0_46, %c0_47, %c0_48] : memref<1x1x128xf32, #tpu.memory_space<vmem>>, vector<1x1x128xf32>
    %134 = vector.shape_cast %133 : vector<1x1x128xf32> to vector<1x128xf32>
    %135 = vector.broadcast %134 : vector<1x128xf32> to vector<8x128xf32>
    %136 = arith.addf %132, %135 : vector<8x128xf32>
    %cst_49 = arith.constant 0.000000e+00 : f32
    %137 = vector.broadcast %cst_49 : f32 to vector<8x128xf32>
    %138 = arith.maximumf %136, %137 : vector<8x128xf32>
    %139 = arith.truncf %138 : vector<8x128xf32> to vector<8x128xbf16>
    %c0_50 = arith.constant 0 : index
    %c0_51 = arith.constant 0 : index
    %c0_52 = arith.constant 0 : index
    %140 = vector.load %arg11[%c0_50, %c0_51, %c0_52] : memref<1x128x32xbf16, #tpu.memory_space<vmem>>, vector<1x128x32xbf16>
    %141 = vector.shape_cast %140 : vector<1x128x32xbf16> to vector<128x32xbf16>
    %cst_53 = arith.constant dense<0.000000e+00> : vector<8x32xf32>
    %142 = tpu.matmul %139, %141, %cst_53 {dimension_numbers = #tpu.dot_dimension_numbers<[1], [0], [0], [1], [0, 0, 1, 1], [], []>} : vector<8x128xbf16>, vector<128x32xbf16>, vector<8x32xf32> -> vector<8x32xf32>
    %c0_54 = arith.constant 0 : index
    %c0_55 = arith.constant 0 : index
    %c0_56 = arith.constant 0 : index
    %143 = vector.load %arg12[%c0_54, %c0_55, %c0_56] : memref<1x1x32xf32, #tpu.memory_space<vmem>>, vector<1x1x32xf32>
    %144 = vector.shape_cast %143 : vector<1x1x32xf32> to vector<1x32xf32>
    %145 = vector.broadcast %144 : vector<1x32xf32> to vector<8x32xf32>
    %146 = arith.addf %142, %145 : vector<8x32xf32>
    %147 = arith.addf %146, %128 : vector<8x32xf32>
    %cst_57 = arith.constant dense<0.000000e+00> : vector<8xf32>
    %148 = vector.multi_reduction <add>, %147, %cst_57 [1] : vector<8x32xf32> to vector<8xf32>
    %149 = vector.shape_cast %148 : vector<8xf32> to vector<8x1xf32>
    %cst_58 = arith.constant 3.200000e+01 : f32
    %150 = vector.broadcast %cst_58 : f32 to vector<8x1xf32>
    %151 = arith.divf %149, %150 : vector<8x1xf32>
    %152 = arith.mulf %147, %147 : vector<8x32xf32>
    %cst_59 = arith.constant dense<0.000000e+00> : vector<8xf32>
    %153 = vector.multi_reduction <add>, %152, %cst_59 [1] : vector<8x32xf32> to vector<8xf32>
    %154 = vector.shape_cast %153 : vector<8xf32> to vector<8x1xf32>
    %cst_60 = arith.constant 3.200000e+01 : f32
    %155 = vector.broadcast %cst_60 : f32 to vector<8x1xf32>
    %156 = arith.divf %154, %155 : vector<8x1xf32>
    %157 = arith.mulf %151, %151 : vector<8x1xf32>
    %158 = arith.subf %156, %157 : vector<8x1xf32>
    %159 = vector.broadcast %151 : vector<8x1xf32> to vector<8x32xf32>
    %160 = arith.subf %147, %159 : vector<8x32xf32>
    %cst_61 = arith.constant 9.99999974E-6 : f32
    %161 = vector.broadcast %cst_61 : f32 to vector<8x1xf32>
    %162 = arith.addf %158, %161 : vector<8x1xf32>
    %163 = math.rsqrt %162 : vector<8x1xf32>
    %164 = vector.broadcast %163 : vector<8x1xf32> to vector<8x32xf32>
    %165 = arith.mulf %160, %164 : vector<8x32xf32>
    %c0_62 = arith.constant 0 : index
    %c0_63 = arith.constant 0 : index
    %c0_64 = arith.constant 0 : index
    %166 = vector.load %arg13[%c0_62, %c0_63, %c0_64] : memref<1x1x32xf32, #tpu.memory_space<vmem>>, vector<1x1x32xf32>
    %167 = vector.shape_cast %166 : vector<1x1x32xf32> to vector<1x32xf32>
    %168 = vector.broadcast %167 : vector<1x32xf32> to vector<8x32xf32>
    %169 = arith.mulf %165, %168 : vector<8x32xf32>
    %c0_65 = arith.constant 0 : index
    %c0_66 = arith.constant 0 : index
    %c0_67 = arith.constant 0 : index
    %170 = vector.load %arg14[%c0_65, %c0_66, %c0_67] : memref<1x1x32xf32, #tpu.memory_space<vmem>>, vector<1x1x32xf32>
    %171 = vector.shape_cast %170 : vector<1x1x32xf32> to vector<1x32xf32>
    %172 = vector.broadcast %171 : vector<1x32xf32> to vector<8x32xf32>
    %173 = arith.addf %169, %172 : vector<8x32xf32>
    %c0_68 = arith.constant 0 : index
    %c0_69 = arith.constant 0 : index
    %174 = vector.load %arg16[%c0_68, %c0_69] : memref<8x32xf32, #tpu.memory_space<vmem>>, vector<8x32xf32>
    tpu.vector_store %arg16[%c0_68, %c0_69], %173 {strides = array<i32>} : memref<8x32xf32, #tpu.memory_space<vmem>>, vector<8x32xf32>,
    %c1_i32 = arith.constant 1 : i32
    %175 = arith.cmpi eq, %arg1, %c1_i32 : i32
    %176 = arith.extui %175 : i1 to i32
    %c0_i32_70 = arith.constant 0 : i32
    %177 = arith.cmpi ne, %176, %c0_i32_70 : i32
    scf.if %177 {
      %178 = vector.shape_cast %173 : vector<8x32xf32> to vector<1x8x32xf32>
      %c0_71 = arith.constant 0 : index
      %c0_72 = arith.constant 0 : index
      %c0_73 = arith.constant 0 : index
      %179 = vector.load %arg15[%c0_71, %c0_72, %c0_73] : memref<1x8x32xf32, #tpu.memory_space<vmem>>, vector<1x8x32xf32>
      tpu.vector_store %arg15[%c0_71, %c0_72, %c0_73], %178 {strides = array<i32>} : memref<1x8x32xf32, #tpu.memory_space<vmem>>, vector<1x8x32xf32>,
    } else {
    }
    return
  }
  func.func @transform_0(%arg0: i32, %arg1: i32) -> (i32, i32, i32) {
    %c0_i32 = arith.constant 0 : i32
    %c0_i32_0 = arith.constant 0 : i32
    %c0_i32_1 = arith.constant 0 : i32
    return %arg0, %c0_i32, %c0_i32_0 : i32, i32, i32
  }
  func.func @transform_1(%arg0: i32, %arg1: i32) -> (i32, i32, i32) {
    %c0_i32 = arith.constant 0 : i32
    %c0_i32_0 = arith.constant 0 : i32
    %c0_i32_1 = arith.constant 0 : i32
    return %arg1, %c0_i32, %c0_i32_0 : i32, i32, i32
  }
  func.func @transform_2(%arg0: i32, %arg1: i32) -> (i32, i32, i32) {
    %c0_i32 = arith.constant 0 : i32
    %c0_i32_0 = arith.constant 0 : i32
    %c0_i32_1 = arith.constant 0 : i32
    return %arg1, %c0_i32, %c0_i32_0 : i32, i32, i32
  }
  func.func @transform_3(%arg0: i32, %arg1: i32) -> (i32, i32, i32) {
    %c0_i32 = arith.constant 0 : i32
    %c0_i32_0 = arith.constant 0 : i32
    %c0_i32_1 = arith.constant 0 : i32
    return %arg1, %c0_i32, %c0_i32_0 : i32, i32, i32
  }
  func.func @transform_4(%arg0: i32, %arg1: i32) -> (i32, i32, i32) {
    %c0_i32 = arith.constant 0 : i32
    %c0_i32_0 = arith.constant 0 : i32
    %c0_i32_1 = arith.constant 0 : i32
    return %arg1, %c0_i32, %c0_i32_0 : i32, i32, i32
  }
  func.func @transform_5(%arg0: i32, %arg1: i32) -> (i32, i32, i32) {
    %c0_i32 = arith.constant 0 : i32
    %c0_i32_0 = arith.constant 0 : i32
    %c0_i32_1 = arith.constant 0 : i32
    return %arg1, %c0_i32, %c0_i32_0 : i32, i32, i32
  }
  func.func @transform_6(%arg0: i32, %arg1: i32) -> (i32, i32, i32) {
    %c0_i32 = arith.constant 0 : i32
    %c0_i32_0 = arith.constant 0 : i32
    %c0_i32_1 = arith.constant 0 : i32
    return %arg1, %c0_i32, %c0_i32_0 : i32, i32, i32
  }
  func.func @transform_7(%arg0: i32, %arg1: i32) -> (i32, i32, i32) {
    %c0_i32 = arith.constant 0 : i32
    %c0_i32_0 = arith.constant 0 : i32
    %c0_i32_1 = arith.constant 0 : i32
    return %arg1, %c0_i32, %c0_i32_0 : i32, i32, i32
  }
  func.func @transform_8(%arg0: i32, %arg1: i32) -> (i32, i32, i32) {
    %c0_i32 = arith.constant 0 : i32
    %c0_i32_0 = arith.constant 0 : i32
    %c0_i32_1 = arith.constant 0 : i32
    return %arg1, %c0_i32, %c0_i32_0 : i32, i32, i32
  }
  func.func @transform_9(%arg0: i32, %arg1: i32) -> (i32, i32, i32) {
    %c0_i32 = arith.constant 0 : i32
    %c0_i32_0 = arith.constant 0 : i32
    %c0_i32_1 = arith.constant 0 : i32
    return %arg1, %c0_i32, %c0_i32_0 : i32, i32, i32
  }
  func.func @transform_10(%arg0: i32, %arg1: i32) -> (i32, i32, i32) {
    %c0_i32 = arith.constant 0 : i32
    %c0_i32_0 = arith.constant 0 : i32
    %c0_i32_1 = arith.constant 0 : i32
    return %arg1, %c0_i32, %c0_i32_0 : i32, i32, i32
  }
  func.func @transform_11(%arg0: i32, %arg1: i32) -> (i32, i32, i32) {
    %c0_i32 = arith.constant 0 : i32
    %c0_i32_0 = arith.constant 0 : i32
    %c0_i32_1 = arith.constant 0 : i32
    return %arg1, %c0_i32, %c0_i32_0 : i32, i32, i32
  }
  func.func @transform_12(%arg0: i32, %arg1: i32) -> (i32, i32, i32) {
    %c0_i32 = arith.constant 0 : i32
    %c0_i32_0 = arith.constant 0 : i32
    %c0_i32_1 = arith.constant 0 : i32
    return %arg1, %c0_i32, %c0_i32_0 : i32, i32, i32
  }
  func.func @transform_13(%arg0: i32, %arg1: i32) -> (i32, i32, i32) {
    %c0_i32 = arith.constant 0 : i32
    %c0_i32_0 = arith.constant 0 : i32
    %c0_i32_1 = arith.constant 0 : i32
    return %arg0, %c0_i32, %c0_i32_0 : i32, i32, i32
  }
}

</mosaic_0001>

<llo_original>
// kernel: transformer_encoder.1
$region0: #{transformer_encoder.1}
  #allocation0 [shape = 'u32[]', space=smem, size = 0x4, offset = 0x4, fixed_abs, tag = 'smem constant byte address 0x4 - core index']
  #allocation1 [shape = 'u32[72,128]{1,0:T(1,128)}', space=vmem, size = 0x9000, scoped, tag = 'internal scratch']
  #allocation2 [shape = 'f32[8,32]{1,0:T(8,128)}', space=vmem, size = 0x1000, scoped, tag = 'scratch operand']
  %s0 = inlined_call_operand.vmem [shape: f32[2,8,32], index: 0, kind: input, shape index: {}]
  %s1 = inlined_call_operand.vmem [shape: bf16[2,32,96], index: 1, kind: input, shape index: {}]
  %s2 = inlined_call_operand.vmem [shape: f32[2,1,96], index: 2, kind: input, shape index: {}]
  %s3 = inlined_call_operand.vmem [shape: bf16[2,32,32], index: 3, kind: input, shape index: {}]
  %s4 = inlined_call_operand.vmem [shape: f32[2,1,32], index: 4, kind: input, shape index: {}]
  %s5 = inlined_call_operand.vmem [shape: f32[2,1,32], index: 5, kind: input, shape index: {}]
  %s6 = inlined_call_operand.vmem [shape: f32[2,1,32], index: 6, kind: input, shape index: {}]
  %s7 = inlined_call_operand.vmem [shape: bf16[2,32,128], index: 7, kind: input, shape index: {}]
  %s8 = inlined_call_operand.vmem [shape: f32[2,1,128], index: 8, kind: input, shape index: {}]
  %s9 = inlined_call_operand.vmem [shape: bf16[2,128,32], index: 9, kind: input, shape index: {}]
  %s10 = inlined_call_operand.vmem [shape: f32[2,1,32], index: 10, kind: input, shape index: {}]
  %s11 = inlined_call_operand.vmem [shape: f32[2,1,32], index: 11, kind: input, shape index: {}]
  %s12 = inlined_call_operand.vmem [shape: f32[2,1,32], index: 12, kind: input, shape index: {}]
  %s13 = inlined_call_operand.hbm [shape: f32[2,8,32], index: 13, kind: output, shape index: {}]
  %s14 = sld [smem:[#allocation0]]
  $region93: #{transformer_encoder.1} parent=0
    _
  %s16 = ssub.s32 1, %s14
  %s17 = scalar_select 0, %s16, %s14
  $region1: #{transformer_encoder.1} parent=0
    #allocation3 [shape = 'u8[8192]{0}', space=vmem, size = 0x2000, scoped, tag = 'output window, operand 0']
    #allocation4 [shape = 's32[2]{0}', space=sflag, size = 0x8, scoped, tag = 'scoped memory for transformer_encoder.1']
    %18 = vsyncpa [#allocation4], 0
    %s19 = scalar_lea.sflag [#allocation4], 1
    %20 = vsyncpa %s19, 0
    loop: start=0, step=1, limit=6
    $region2: #{transformer_encoder.1} parent=1 // loop_pre_header
      _
    $region3: #{transformer_encoder.1} parent=1 // loop_header
      %s22 = sphi 0, %s26
      %p23 = scmp.ge.s32.totalorder %s22, 6
      %s29 = sphi 0, %s41
      %s30 = sphi 0, %s37
      %s31 = sphi 0, %s29
      %s32 = sphi 0, %s30
      %s33 = sphi 0, %s31
      %s34 = sphi 0, %s32
      %s44 = sphi 0, %s46
      %s47 = sphi 0, %s44
      %s48 = sphi 0, %s47
      %s64 = sphi 0, %s48
      %s70 = sphi 0, %s72
      %s73 = sphi 0, %s70
      %s74 = sphi 0, %s73
      %s90 = sphi 0, %s74
      %s96 = sphi 0, %s98
      %s99 = sphi 0, %s96
      %s100 = sphi 0, %s99
      %s116 = sphi 0, %s100
      %s122 = sphi 0, %s124
      %s125 = sphi 0, %s122
      %s126 = sphi 0, %s125
      %s142 = sphi 0, %s126
      %s148 = sphi 0, %s150
      %s151 = sphi 0, %s148
      %s152 = sphi 0, %s151
      %s168 = sphi 0, %s152
      %s174 = sphi 0, %s176
      %s177 = sphi 0, %s174
      %s178 = sphi 0, %s177
      %s194 = sphi 0, %s178
      %s200 = sphi 0, %s202
      %s203 = sphi 0, %s200
      %s204 = sphi 0, %s203
      %s220 = sphi 0, %s204
      %s226 = sphi 0, %s228
      %s229 = sphi 0, %s226
      %s230 = sphi 0, %s229
      %s246 = sphi 0, %s230
      %s252 = sphi 0, %s254
      %s255 = sphi 0, %s252
      %s256 = sphi 0, %s255
      %s272 = sphi 0, %s256
      %s278 = sphi 0, %s280
      %s281 = sphi 0, %s278
      %s282 = sphi 0, %s281
      %s298 = sphi 0, %s282
      %s304 = sphi 0, %s306
      %s307 = sphi 0, %s304
      %s308 = sphi 0, %s307
      %s324 = sphi 0, %s308
      %s330 = sphi 0, %s332
      %s333 = sphi 0, %s330
      %s334 = sphi 0, %s333
      %s350 = sphi 0, %s334
      %s356 = sphi 0, %s358
      %s359 = sphi 0, %s356
      %s360 = sphi 0, %s359
      %s376 = sphi 0, %s360
      %s382 = sphi 0, %s384
      %s385 = sphi 0, %s382
      %s386 = sphi 0, %s385
      %s402 = sphi 0, %s386
    $region4: #{transformer_encoder.1} parent=1 // loop_header_branch
      %25 = sbr.rel (%p23) target = $region8
    $region5: #{transformer_encoder.1} parent=1 // loop_body
      %s27 = ssub.s32 %s22, 1
      %s28 = ssub.s32 %s22, 2
      %s35 = sadd.s32 1, %s30
      %p36 = scmp.ge.s32.totalorder %s35, 2
      %s37 = scalar_select %p36, 0, %s35
      %s38 = sadd.s32 1, %s29
      %s39 = scalar_select %p36, %s38, %s29
      %p40 = scmp.ge.s32.totalorder %s39, 2
      %s41 = scalar_select %p40, 0, %s39
      %s42 = ssub.s32 %s29, %s41
      %p43 = scmp.eq.s32.totalorder %s42, 0
      %s45 = sadd.s32 %s44, 1
      %s46 = scalar_select %p43, %s44, %s45
      %p49 = pneg %p43
      %p50 = scmp.eq.s32.totalorder %s22, 3
      %p51 = por %p49, %p50
      %p52 = scmp.ne.s32.totalorder %s44, %s47
      %p53 = scmp.eq.s32.totalorder %s22, 0
      %p54 = por %p52, %p53
      %p55 = scmp.ne.s32.totalorder %s44, %s47
      %p56 = scmp.eq.s32.totalorder %s27, 3
      %p57 = por %p55, %p56
      %p58 = scmp.ne.s32.totalorder %s47, %s48
      %p59 = scmp.eq.s32.totalorder %s27, 0
      %p60 = por %p58, %p59
      %p61 = scmp.ne.s32.totalorder %s47, %s48
      %p62 = scmp.eq.s32.totalorder %s28, 3
      %p63 = por %p61, %p62
      %p65 = scmp.ne.s32.totalorder %s48, %s64
      %p66 = scmp.eq.s32.totalorder %s28, 0
      %p67 = por %p65, %p66
      %s68 = ssub.s32 %s30, %s37
      %p69 = scmp.eq.s32.totalorder %s68, 0
      %s71 = sadd.s32 %s70, 1
      %s72 = scalar_select %p69, %s70, %s71
      %p75 = pneg %p69
      %p76 = scmp.eq.s32.totalorder %s22, 3
      %p77 = por %p75, %p76
      %p78 = scmp.ne.s32.totalorder %s70, %s73
      %p79 = scmp.eq.s32.totalorder %s22, 0
      %p80 = por %p78, %p79
      %p81 = scmp.ne.s32.totalorder %s70, %s73
      %p82 = scmp.eq.s32.totalorder %s27, 3
      %p83 = por %p81, %p82
      %p84 = scmp.ne.s32.totalorder %s73, %s74
      %p85 = scmp.eq.s32.totalorder %s27, 0
      %p86 = por %p84, %p85
      %p87 = scmp.ne.s32.totalorder %s73, %s74
      %p88 = scmp.eq.s32.totalorder %s28, 3
      %p89 = por %p87, %p88
      %p91 = scmp.ne.s32.totalorder %s74, %s90
      %p92 = scmp.eq.s32.totalorder %s28, 0
      %p93 = por %p91, %p92
      %s94 = ssub.s32 %s30, %s37
      %p95 = scmp.eq.s32.totalorder %s94, 0
      %s97 = sadd.s32 %s96, 1
      %s98 = scalar_select %p95, %s96, %s97
      %p101 = pneg %p95
      %p102 = scmp.eq.s32.totalorder %s22, 3
      %p103 = por %p101, %p102
      %p104 = scmp.ne.s32.totalorder %s96, %s99
      %p105 = scmp.eq.s32.totalorder %s22, 0
      %p106 = por %p104, %p105
      %p107 = scmp.ne.s32.totalorder %s96, %s99
      %p108 = scmp.eq.s32.totalorder %s27, 3
      %p109 = por %p107, %p108
      %p110 = scmp.ne.s32.totalorder %s99, %s100
      %p111 = scmp.eq.s32.totalorder %s27, 0
      %p112 = por %p110, %p111
      %p113 = scmp.ne.s32.totalorder %s99, %s100
      %p114 = scmp.eq.s32.totalorder %s28, 3
      %p115 = por %p113, %p114
      %p117 = scmp.ne.s32.totalorder %s100, %s116
      %p118 = scmp.eq.s32.totalorder %s28, 0
      %p119 = por %p117, %p118
      %s120 = ssub.s32 %s30, %s37
      %p121 = scmp.eq.s32.totalorder %s120, 0
      %s123 = sadd.s32 %s122, 1
      %s124 = scalar_select %p121, %s122, %s123
      %p127 = pneg %p121
      %p128 = scmp.eq.s32.totalorder %s22, 3
      %p129 = por %p127, %p128
      %p130 = scmp.ne.s32.totalorder %s122, %s125
      %p131 = scmp.eq.s32.totalorder %s22, 0
      %p132 = por %p130, %p131
      %p133 = scmp.ne.s32.totalorder %s122, %s125
      %p134 = scmp.eq.s32.totalorder %s27, 3
      %p135 = por %p133, %p134
      %p136 = scmp.ne.s32.totalorder %s125, %s126
      %p137 = scmp.eq.s32.totalorder %s27, 0
      %p138 = por %p136, %p137
      %p139 = scmp.ne.s32.totalorder %s125, %s126
      %p140 = scmp.eq.s32.totalorder %s28, 3
      %p141 = por %p139, %p140
      %p143 = scmp.ne.s32.totalorder %s126, %s142
      %p144 = scmp.eq.s32.totalorder %s28, 0
      %p145 = por %p143, %p144
      %s146 = ssub.s32 %s30, %s37
      %p147 = scmp.eq.s32.totalorder %s146, 0
      %s149 = sadd.s32 %s148, 1
      %s150 = scalar_select %p147, %s148, %s149
      %p153 = pneg %p147
      %p154 = scmp.eq.s32.totalorder %s22, 3
      %p155 = por %p153, %p154
      %p156 = scmp.ne.s32.totalorder %s148, %s151
      %p157 = scmp.eq.s32.totalorder %s22, 0
      %p158 = por %p156, %p157
      %p159 = scmp.ne.s32.totalorder %s148, %s151
      %p160 = scmp.eq.s32.totalorder %s27, 3
      %p161 = por %p159, %p160
      %p162 = scmp.ne.s32.totalorder %s151, %s152
      %p163 = scmp.eq.s32.totalorder %s27, 0
      %p164 = por %p162, %p163
      %p165 = scmp.ne.s32.totalorder %s151, %s152
      %p166 = scmp.eq.s32.totalorder %s28, 3
      %p167 = por %p165, %p166
      %p169 = scmp.ne.s32.totalorder %s152, %s168
      %p170 = scmp.eq.s32.totalorder %s28, 0
      %p171 = por %p169, %p170
      %s172 = ssub.s32 %s30, %s37
      %p173 = scmp.eq.s32.totalorder %s172, 0
      %s175 = sadd.s32 %s174, 1
      %s176 = scalar_select %p173, %s174, %s175
      %p179 = pneg %p173
      %p180 = scmp.eq.s32.totalorder %s22, 3
      %p181 = por %p179, %p180
      %p182 = scmp.ne.s32.totalorder %s174, %s177
      %p183 = scmp.eq.s32.totalorder %s22, 0
      %p184 = por %p182, %p183
      %p185 = scmp.ne.s32.totalorder %s174, %s177
      %p186 = scmp.eq.s32.totalorder %s27, 3
      %p187 = por %p185, %p186
      %p188 = scmp.ne.s32.totalorder %s177, %s178
      %p189 = scmp.eq.s32.totalorder %s27, 0
      %p190 = por %p188, %p189
      %p191 = scmp.ne.s32.totalorder %s177, %s178
      %p192 = scmp.eq.s32.totalorder %s28, 3
      %p193 = por %p191, %p192
      %p195 = scmp.ne.s32.totalorder %s178, %s194
      %p196 = scmp.eq.s32.totalorder %s28, 0
      %p197 = por %p195, %p196
      %s198 = ssub.s32 %s30, %s37
      %p199 = scmp.eq.s32.totalorder %s198, 0
      %s201 = sadd.s32 %s200, 1
      %s202 = scalar_select %p199, %s200, %s201
      %p205 = pneg %p199
      %p206 = scmp.eq.s32.totalorder %s22, 3
      %p207 = por %p205, %p206
      %p208 = scmp.ne.s32.totalorder %s200, %s203
      %p209 = scmp.eq.s32.totalorder %s22, 0
      %p210 = por %p208, %p209
      %p211 = scmp.ne.s32.totalorder %s200, %s203
      %p212 = scmp.eq.s32.totalorder %s27, 3
      %p213 = por %p211, %p212
      %p214 = scmp.ne.s32.totalorder %s203, %s204
      %p215 = scmp.eq.s32.totalorder %s27, 0
      %p216 = por %p214, %p215
      %p217 = scmp.ne.s32.totalorder %s203, %s204
      %p218 = scmp.eq.s32.totalorder %s28, 3
      %p219 = por %p217, %p218
      %p221 = scmp.ne.s32.totalorder %s204, %s220
      %p222 = scmp.eq.s32.totalorder %s28, 0
      %p223 = por %p221, %p222
      %s224 = ssub.s32 %s30, %s37
      %p225 = scmp.eq.s32.totalorder %s224, 0
      %s227 = sadd.s32 %s226, 1
      %s228 = scalar_select %p225, %s226, %s227
      %p231 = pneg %p225
      %p232 = scmp.eq.s32.totalorder %s22, 3
      %p233 = por %p231, %p232
      %p234 = scmp.ne.s32.totalorder %s226, %s229
      %p235 = scmp.eq.s32.totalorder %s22, 0
      %p236 = por %p234, %p235
      %p237 = scmp.ne.s32.totalorder %s226, %s229
      %p238 = scmp.eq.s32.totalorder %s27, 3
      %p239 = por %p237, %p238
      %p240 = scmp.ne.s32.totalorder %s229, %s230
      %p241 = scmp.eq.s32.totalorder %s27, 0
      %p242 = por %p240, %p241
      %p243 = scmp.ne.s32.totalorder %s229, %s230
      %p244 = scmp.eq.s32.totalorder %s28, 3
      %p245 = por %p243, %p244
      %p247 = scmp.ne.s32.totalorder %s230, %s246
      %p248 = scmp.eq.s32.totalorder %s28, 0
      %p249 = por %p247, %p248
      %s250 = ssub.s32 %s30, %s37
      %p251 = scmp.eq.s32.totalorder %s250, 0
      %s253 = sadd.s32 %s252, 1
      %s254 = scalar_select %p251, %s252, %s253
      %p257 = pneg %p251
      %p258 = scmp.eq.s32.totalorder %s22, 3
      %p259 = por %p257, %p258
      %p260 = scmp.ne.s32.totalorder %s252, %s255
      %p261 = scmp.eq.s32.totalorder %s22, 0
      %p262 = por %p260, %p261
      %p263 = scmp.ne.s32.totalorder %s252, %s255
      %p264 = scmp.eq.s32.totalorder %s27, 3
      %p265 = por %p263, %p264
      %p266 = scmp.ne.s32.totalorder %s255, %s256
      %p267 = scmp.eq.s32.totalorder %s27, 0
      %p268 = por %p266, %p267
      %p269 = scmp.ne.s32.totalorder %s255, %s256
      %p270 = scmp.eq.s32.totalorder %s28, 3
      %p271 = por %p269, %p270
      %p273 = scmp.ne.s32.totalorder %s256, %s272
      %p274 = scmp.eq.s32.totalorder %s28, 0
      %p275 = por %p273, %p274
      %s276 = ssub.s32 %s30, %s37
      %p277 = scmp.eq.s32.totalorder %s276, 0
      %s279 = sadd.s32 %s278, 1
      %s280 = scalar_select %p277, %s278, %s279
      %p283 = pneg %p277
      %p284 = scmp.eq.s32.totalorder %s22, 3
      %p285 = por %p283, %p284
      %p286 = scmp.ne.s32.totalorder %s278, %s281
      %p287 = scmp.eq.s32.totalorder %s22, 0
      %p288 = por %p286, %p287
      %p289 = scmp.ne.s32.totalorder %s278, %s281
      %p290 = scmp.eq.s32.totalorder %s27, 3
      %p291 = por %p289, %p290
      %p292 = scmp.ne.s32.totalorder %s281, %s282
      %p293 = scmp.eq.s32.totalorder %s27, 0
      %p294 = por %p292, %p293
      %p295 = scmp.ne.s32.totalorder %s281, %s282
      %p296 = scmp.eq.s32.totalorder %s28, 3
      %p297 = por %p295, %p296
      %p299 = scmp.ne.s32.totalorder %s282, %s298
      %p300 = scmp.eq.s32.totalorder %s28, 0
      %p301 = por %p299, %p300
      %s302 = ssub.s32 %s30, %s37
      %p303 = scmp.eq.s32.totalorder %s302, 0
      %s305 = sadd.s32 %s304, 1
      %s306 = scalar_select %p303, %s304, %s305
      %p309 = pneg %p303
      %p310 = scmp.eq.s32.totalorder %s22, 3
      %p311 = por %p309, %p310
      %p312 = scmp.ne.s32.totalorder %s304, %s307
      %p313 = scmp.eq.s32.totalorder %s22, 0
      %p314 = por %p312, %p313
      %p315 = scmp.ne.s32.totalorder %s304, %s307
      %p316 = scmp.eq.s32.totalorder %s27, 3
      %p317 = por %p315, %p316
      %p318 = scmp.ne.s32.totalorder %s307, %s308
      %p319 = scmp.eq.s32.totalorder %s27, 0
      %p320 = por %p318, %p319
      %p321 = scmp.ne.s32.totalorder %s307, %s308
      %p322 = scmp.eq.s32.totalorder %s28, 3
      %p323 = por %p321, %p322
      %p325 = scmp.ne.s32.totalorder %s308, %s324
      %p326 = scmp.eq.s32.totalorder %s28, 0
      %p327 = por %p325, %p326
      %s328 = ssub.s32 %s30, %s37
      %p329 = scmp.eq.s32.totalorder %s328, 0
      %s331 = sadd.s32 %s330, 1
      %s332 = scalar_select %p329, %s330, %s331
      %p335 = pneg %p329
      %p336 = scmp.eq.s32.totalorder %s22, 3
      %p337 = por %p335, %p336
      %p338 = scmp.ne.s32.totalorder %s330, %s333
      %p339 = scmp.eq.s32.totalorder %s22, 0
      %p340 = por %p338, %p339
      %p341 = scmp.ne.s32.totalorder %s330, %s333
      %p342 = scmp.eq.s32.totalorder %s27, 3
      %p343 = por %p341, %p342
      %p344 = scmp.ne.s32.totalorder %s333, %s334
      %p345 = scmp.eq.s32.totalorder %s27, 0
      %p346 = por %p344, %p345
      %p347 = scmp.ne.s32.totalorder %s333, %s334
      %p348 = scmp.eq.s32.totalorder %s28, 3
      %p349 = por %p347, %p348
      %p351 = scmp.ne.s32.totalorder %s334, %s350
      %p352 = scmp.eq.s32.totalorder %s28, 0
      %p353 = por %p351, %p352
      %s354 = ssub.s32 %s30, %s37
      %p355 = scmp.eq.s32.totalorder %s354, 0
      %s357 = sadd.s32 %s356, 1
      %s358 = scalar_select %p355, %s356, %s357
      %p361 = pneg %p355
      %p362 = scmp.eq.s32.totalorder %s22, 3
      %p363 = por %p361, %p362
      %p364 = scmp.ne.s32.totalorder %s356, %s359
      %p365 = scmp.eq.s32.totalorder %s22, 0
      %p366 = por %p364, %p365
      %p367 = scmp.ne.s32.totalorder %s356, %s359
      %p368 = scmp.eq.s32.totalorder %s27, 3
      %p369 = por %p367, %p368
      %p370 = scmp.ne.s32.totalorder %s359, %s360
      %p371 = scmp.eq.s32.totalorder %s27, 0
      %p372 = por %p370, %p371
      %p373 = scmp.ne.s32.totalorder %s359, %s360
      %p374 = scmp.eq.s32.totalorder %s28, 3
      %p375 = por %p373, %p374
      %p377 = scmp.ne.s32.totalorder %s360, %s376
      %p378 = scmp.eq.s32.totalorder %s28, 0
      %p379 = por %p377, %p378
      %s380 = ssub.s32 %s29, %s41
      %p381 = scmp.eq.s32.totalorder %s380, 0
      %s383 = sadd.s32 %s382, 1
      %s384 = scalar_select %p381, %s382, %s383
      %p387 = pneg %p381
      %p388 = scmp.eq.s32.totalorder %s22, 3
      %p389 = por %p387, %p388
      %p390 = scmp.ne.s32.totalorder %s382, %s385
      %p391 = scmp.eq.s32.totalorder %s22, 0
      %p392 = por %p390, %p391
      %p393 = scmp.ne.s32.totalorder %s382, %s385
      %p394 = scmp.eq.s32.totalorder %s27, 3
      %p395 = por %p393, %p394
      %p396 = scmp.ne.s32.totalorder %s385, %s386
      %p397 = scmp.eq.s32.totalorder %s27, 0
      %p398 = por %p396, %p397
      %p399 = scmp.ne.s32.totalorder %s385, %s386
      %p400 = scmp.eq.s32.totalorder %s28, 3
      %p401 = por %p399, %p400
      %p403 = scmp.ne.s32.totalorder %s386, %s402
      %p404 = scmp.eq.s32.totalorder %s28, 0
      %p405 = por %p403, %p404
      %p406 = scmp.le.s32.totalorder 1, %s22
      %p407 = scmp.lt.s32.totalorder %s22, 5
      %p408 = pnand %p406, %p407
      %p409 = pneg %p408
      // Predicated region
      $region9: #{transformer_encoder.1} parent=5 // pred_check
        _
      $region10: #{transformer_encoder.1} parent=5 // pred_check_branch
        %411 = sbr.rel (%p408) target = $region12
      $region11: #{transformer_encoder.1} parent=5 // pred_region
        %s412 = ssub.s32 %s22, 1
      $region12: #{transformer_encoder.1} parent=5 // pred_fallthru
        _
      %p413 = scmp.lt.s32.totalorder %s22, 4
      // Predicated region
      $region13: #{transformer_encoder.1} parent=5 // pred_check
        %p414 = pneg %p413
      $region14: #{transformer_encoder.1} parent=5 // pred_check_branch
        %416 = sbr.rel (%p414) target = $region16
      $region15: #{transformer_encoder.1} parent=5 // pred_region
        // Predicated region
        $region17: #{transformer_encoder.1} parent=15 // pred_check
          %p417 = pneg %p54
        $region18: #{transformer_encoder.1} parent=15 // pred_check_branch
          %419 = sbr.rel (%p417) target = $region20
        $region19: #{transformer_encoder.1} parent=15 // pred_region
          %p420 = scmp.lt.s32.totalorder %s29, 1
          %s421 = scalar_select %p420, %s29, 1
          %s422 = smul.addr %s421, 8
          %s423 = scalar_lea.vmem %s0, %s422
        $region20: #{transformer_encoder.1} parent=15 // pred_fallthru
          _
        // Predicated region
        $region21: #{transformer_encoder.1} parent=15 // pred_check
          %p424 = pneg %p80
        $region22: #{transformer_encoder.1} parent=15 // pred_check_branch
          %426 = sbr.rel (%p424) target = $region24
        $region23: #{transformer_encoder.1} parent=15 // pred_region
          %p427 = scmp.lt.s32.totalorder %s30, 1
          %s428 = scalar_select %p427, %s30, 1
          %s429 = smul.addr %s428, 4
          %s430 = smul.addr %s429, 4
          %s431 = scalar_lea.vmem %s1, %s430
        $region24: #{transformer_encoder.1} parent=15 // pred_fallthru
          _
        // Predicated region
        $region25: #{transformer_encoder.1} parent=15 // pred_check
          %p432 = pneg %p106
        $region26: #{transformer_encoder.1} parent=15 // pred_check_branch
          %434 = sbr.rel (%p432) target = $region28
        $region27: #{transformer_encoder.1} parent=15 // pred_region
          %p435 = scmp.lt.s32.totalorder %s30, 1
          %s436 = scalar_select %p435, %s30, 1
          %s437 = scalar_lea.vmem %s2, %s436
        $region28: #{transformer_encoder.1} parent=15 // pred_fallthru
          _
        // Predicated region
        $region29: #{transformer_encoder.1} parent=15 // pred_check
          %p438 = pneg %p132
        $region30: #{transformer_encoder.1} parent=15 // pred_check_branch
          %440 = sbr.rel (%p438) target = $region32
        $region31: #{transformer_encoder.1} parent=15 // pred_region
          %p441 = scmp.lt.s32.totalorder %s30, 1
          %s442 = scalar_select %p441, %s30, 1
          %s443 = smul.addr %s442, 4
          %s444 = smul.addr %s443, 4
          %s445 = scalar_lea.vmem %s3, %s444
        $region32: #{transformer_encoder.1} parent=15 // pred_fallthru
          _
        // Predicated region
        $region33: #{transformer_encoder.1} parent=15 // pred_check
          %p446 = pneg %p158
        $region34: #{transformer_encoder.1} parent=15 // pred_check_branch
          %448 = sbr.rel (%p446) target = $region36
        $region35: #{transformer_encoder.1} parent=15 // pred_region
          %p449 = scmp.lt.s32.totalorder %s30, 1
          %s450 = scalar_select %p449, %s30, 1
          %s451 = scalar_lea.vmem %s4, %s450
        $region36: #{transformer_encoder.1} parent=15 // pred_fallthru
          _
        // Predicated region
        $region37: #{transformer_encoder.1} parent=15 // pred_check
          %p452 = pneg %p184
        $region38: #{transformer_encoder.1} parent=15 // pred_check_branch
          %454 = sbr.rel (%p452) target = $region40
        $region39: #{transformer_encoder.1} parent=15 // pred_region
          %p455 = scmp.lt.s32.totalorder %s30, 1
          %s456 = scalar_select %p455, %s30, 1
          %s457 = scalar_lea.vmem %s5, %s456
        $region40: #{transformer_encoder.1} parent=15 // pred_fallthru
          _
        // Predicated region
        $region41: #{transformer_encoder.1} parent=15 // pred_check
          %p458 = pneg %p210
        $region42: #{transformer_encoder.1} parent=15 // pred_check_branch
          %460 = sbr.rel (%p458) target = $region44
        $region43: #{transformer_encoder.1} parent=15 // pred_region
          %p461 = scmp.lt.s32.totalorder %s30, 1
          %s462 = scalar_select %p461, %s30, 1
          %s463 = scalar_lea.vmem %s6, %s462
        $region44: #{transformer_encoder.1} parent=15 // pred_fallthru
          _
        // Predicated region
        $region45: #{transformer_encoder.1} parent=15 // pred_check
          %p464 = pneg %p236
        $region46: #{transformer_encoder.1} parent=15 // pred_check_branch
          %466 = sbr.rel (%p464) target = $region48
        $region47: #{transformer_encoder.1} parent=15 // pred_region
          %p467 = scmp.lt.s32.totalorder %s30, 1
          %s468 = scalar_select %p467, %s30, 1
          %s469 = smul.addr %s468, 4
          %s470 = smul.addr %s469, 4
          %s471 = scalar_lea.vmem %s7, %s470
        $region48: #{transformer_encoder.1} parent=15 // pred_fallthru
          _
        // Predicated region
        $region49: #{transformer_encoder.1} parent=15 // pred_check
          %p472 = pneg %p262
        $region50: #{transformer_encoder.1} parent=15 // pred_check_branch
          %474 = sbr.rel (%p472) target = $region52
        $region51: #{transformer_encoder.1} parent=15 // pred_region
          %p475 = scmp.lt.s32.totalorder %s30, 1
          %s476 = scalar_select %p475, %s30, 1
          %s477 = scalar_lea.vmem %s8, %s476
        $region52: #{transformer_encoder.1} parent=15 // pred_fallthru
          _
        // Predicated region
        $region53: #{transformer_encoder.1} parent=15 // pred_check
          %p478 = pneg %p288
        $region54: #{transformer_encoder.1} parent=15 // pred_check_branch
          %480 = sbr.rel (%p478) target = $region56
        $region55: #{transformer_encoder.1} parent=15 // pred_region
          %p481 = scmp.lt.s32.totalorder %s30, 1
          %s482 = scalar_select %p481, %s30, 1
          %s483 = smul.addr %s482, 16
          %s484 = smul.addr %s483, 4
          %s485 = scalar_lea.vmem %s9, %s484
        $region56: #{transformer_encoder.1} parent=15 // pred_fallthru
          _
        // Predicated region
        $region57: #{transformer_encoder.1} parent=15 // pred_check
          %p486 = pneg %p314
        $region58: #{transformer_encoder.1} parent=15 // pred_check_branch
          %488 = sbr.rel (%p486) target = $region60
        $region59: #{transformer_encoder.1} parent=15 // pred_region
          %p489 = scmp.lt.s32.totalorder %s30, 1
          %s490 = scalar_select %p489, %s30, 1
          %s491 = scalar_lea.vmem %s10, %s490
        $region60: #{transformer_encoder.1} parent=15 // pred_fallthru
          _
        // Predicated region
        $region61: #{transformer_encoder.1} parent=15 // pred_check
          %p492 = pneg %p340
        $region62: #{transformer_encoder.1} parent=15 // pred_check_branch
          %494 = sbr.rel (%p492) target = $region64
        $region63: #{transformer_encoder.1} parent=15 // pred_region
          %p495 = scmp.lt.s32.totalorder %s30, 1
          %s496 = scalar_select %p495, %s30, 1
          %s497 = scalar_lea.vmem %s11, %s496
        $region64: #{transformer_encoder.1} parent=15 // pred_fallthru
          _
        // Predicated region
        $region65: #{transformer_encoder.1} parent=15 // pred_check
          %p498 = pneg %p366
        $region66: #{transformer_encoder.1} parent=15 // pred_check_branch
          %500 = sbr.rel (%p498) target = $region68
        $region67: #{transformer_encoder.1} parent=15 // pred_region
          %p501 = scmp.lt.s32.totalorder %s30, 1
          %s502 = scalar_select %p501, %s30, 1
          %s503 = scalar_lea.vmem %s12, %s502
        $region68: #{transformer_encoder.1} parent=15 // pred_fallthru
          _
      $region16: #{transformer_encoder.1} parent=5 // pred_fallthru
        _
      %p504 = scmp.le.s32.totalorder 1, %s22
      %p505 = scmp.lt.s32.totalorder %s22, 5
      %p506 = pnand %p504, %p505
      %p507 = pneg %p506
      // Predicated region
      $region69: #{transformer_encoder.1} parent=5 // pred_check
        _
      $region70: #{transformer_encoder.1} parent=5 // pred_check_branch
        %509 = sbr.rel (%p506) target = $region72
      $region71: #{transformer_encoder.1} parent=5 // pred_region
        %s510 = ssub.s32 %s22, 1
        %p511 = scmp.lt.s32.totalorder %s31, 1
        %s512 = scalar_select %p511, %s31, 1
        %s513 = smul.addr %s512, 8
        %s514 = scalar_lea.vmem %s0, %s513
        %p515 = pneg %p60
        %p516 = pneg %p57
        %p517 = scmp.lt.s32.totalorder %s32, 1
        %s518 = scalar_select %p517, %s32, 1
        %s519 = smul.addr %s518, 4
        %s520 = smul.addr %s519, 4
        %s521 = scalar_lea.vmem %s1, %s520
        %p522 = pneg %p86
        %p523 = pneg %p83
        %p524 = scmp.lt.s32.totalorder %s32, 1
        %s525 = scalar_select %p524, %s32, 1
        %s526 = scalar_lea.vmem %s2, %s525
        %p527 = pneg %p112
        %p528 = pneg %p109
        %p529 = scmp.lt.s32.totalorder %s32, 1
        %s530 = scalar_select %p529, %s32, 1
        %s531 = smul.addr %s530, 4
        %s532 = smul.addr %s531, 4
        %s533 = scalar_lea.vmem %s3, %s532
        %p534 = pneg %p138
        %p535 = pneg %p135
        %p536 = scmp.lt.s32.totalorder %s32, 1
        %s537 = scalar_select %p536, %s32, 1
        %s538 = scalar_lea.vmem %s4, %s537
        %p539 = pneg %p164
        %p540 = pneg %p161
        %p541 = scmp.lt.s32.totalorder %s32, 1
        %s542 = scalar_select %p541, %s32, 1
        %s543 = scalar_lea.vmem %s5, %s542
        %p544 = pneg %p190
        %p545 = pneg %p187
        %p546 = scmp.lt.s32.totalorder %s32, 1
        %s547 = scalar_select %p546, %s32, 1
        %s548 = scalar_lea.vmem %s6, %s547
        %p549 = pneg %p216
        %p550 = pneg %p213
        %p551 = scmp.lt.s32.totalorder %s32, 1
        %s552 = scalar_select %p551, %s32, 1
        %s553 = smul.addr %s552, 4
        %s554 = smul.addr %s553, 4
        %s555 = scalar_lea.vmem %s7, %s554
        %p556 = pneg %p242
        %p557 = pneg %p239
        %p558 = scmp.lt.s32.totalorder %s32, 1
        %s559 = scalar_select %p558, %s32, 1
        %s560 = scalar_lea.vmem %s8, %s559
        %p561 = pneg %p268
        %p562 = pneg %p265
        %p563 = scmp.lt.s32.totalorder %s32, 1
        %s564 = scalar_select %p563, %s32, 1
        %s565 = smul.addr %s564, 16
        %s566 = smul.addr %s565, 4
        %s567 = scalar_lea.vmem %s9, %s566
        %p568 = pneg %p294
        %p569 = pneg %p291
        %p570 = scmp.lt.s32.totalorder %s32, 1
        %s571 = scalar_select %p570, %s32, 1
        %s572 = scalar_lea.vmem %s10, %s571
        %p573 = pneg %p320
        %p574 = pneg %p317
        %p575 = scmp.lt.s32.totalorder %s32, 1
        %s576 = scalar_select %p575, %s32, 1
        %s577 = scalar_lea.vmem %s11, %s576
        %p578 = pneg %p346
        %p579 = pneg %p343
        %p580 = scmp.lt.s32.totalorder %s32, 1
        %s581 = scalar_select %p580, %s32, 1
        %s582 = scalar_lea.vmem %s12, %s581
        %p583 = pneg %p372
        %p584 = pneg %p369
        %p585 = pneg %p398
        %p586 = pneg %p395
        %s587 = sand.u32 %s385, 1
        %s588 = scalar_lea.sflag [#allocation4], %s587
        %s589 = sand.u32 %s385, 1
        %s590 = smul.addr %s589, 8
        %s591 = scalar_lea.vmem [#allocation3], %s590
        %p592 = scmp.lt.s32.totalorder %s31, 1
        %s593 = scalar_select %p592, %s31, 1
        %s594 = smul.addr %s593, 8
        %s595 = scalar_lea.vmem %s0, %s594
        %p596 = scmp.lt.s32.totalorder %s32, 1
        %s597 = scalar_select %p596, %s32, 1
        %s598 = smul.addr %s597, 4
        %s599 = smul.addr %s598, 4
        %s600 = scalar_lea.vmem %s1, %s599
        %p601 = scmp.lt.s32.totalorder %s32, 1
        %s602 = scalar_select %p601, %s32, 1
        %s603 = scalar_lea.vmem %s2, %s602
        %p604 = scmp.lt.s32.totalorder %s32, 1
        %s605 = scalar_select %p604, %s32, 1
        %s606 = smul.addr %s605, 4
        %s607 = smul.addr %s606, 4
        %s608 = scalar_lea.vmem %s3, %s607
        %p609 = scmp.lt.s32.totalorder %s32, 1
        %s610 = scalar_select %p609, %s32, 1
        %s611 = scalar_lea.vmem %s4, %s610
        %p612 = scmp.lt.s32.totalorder %s32, 1
        %s613 = scalar_select %p612, %s32, 1
        %s614 = scalar_lea.vmem %s5, %s613
        %p615 = scmp.lt.s32.totalorder %s32, 1
        %s616 = scalar_select %p615, %s32, 1
        %s617 = scalar_lea.vmem %s6, %s616
        %p618 = scmp.lt.s32.totalorder %s32, 1
        %s619 = scalar_select %p618, %s32, 1
        %s620 = smul.addr %s619, 4
        %s621 = smul.addr %s620, 4
        %s622 = scalar_lea.vmem %s7, %s621
        %p623 = scmp.lt.s32.totalorder %s32, 1
        %s624 = scalar_select %p623, %s32, 1
        %s625 = scalar_lea.vmem %s8, %s624
        %p626 = scmp.lt.s32.totalorder %s32, 1
        %s627 = scalar_select %p626, %s32, 1
        %s628 = smul.addr %s627, 16
        %s629 = smul.addr %s628, 4
        %s630 = scalar_lea.vmem %s9, %s629
        %p631 = scmp.lt.s32.totalorder %s32, 1
        %s632 = scalar_select %p631, %s32, 1
        %s633 = scalar_lea.vmem %s10, %s632
        %p634 = scmp.lt.s32.totalorder %s32, 1
        %s635 = scalar_select %p634, %s32, 1
        %s636 = scalar_lea.vmem %s11, %s635
        %p637 = scmp.lt.s32.totalorder %s32, 1
        %s638 = scalar_select %p637, %s32, 1
        %s639 = scalar_lea.vmem %s12, %s638
        %p641 = scmp.eq.s32.totalorder %s32, 0
        // Predicated region
        $region73: #{transformer_encoder.1} parent=71 // pred_check
          %p642 = pneg %p641
        $region74: #{transformer_encoder.1} parent=71 // pred_check_branch
          %644 = sbr.rel (%p642) target = $region76
        $region75: #{transformer_encoder.1} parent=71 // pred_region
          %v645 = vld [vmem:[%s595] sm:$0xff]
          %vm646 = vcmask 261120
          %647 = vst.msk [vmem:[#allocation2] sm:$0xff] %vm646, %v645
        $region76: #{transformer_encoder.1} parent=71 // pred_fallthru
          _
        %v648 = vld [vmem:[#allocation2] sm:$0xff]
        %v649 = vpack.c.bf16 %v648, %v648
        %v650 = vld [vmem:[%s600] sm:$0xf]
        %v651 = vld [vmem:[%s600 + $0x4] sm:$0xf]
        %v652 = vld [vmem:[%s600 + $0x8] sm:$0xf]
        %v653 = vld [vmem:[%s600 + $0xc] sm:$0xf]
        %v654 = vld [vmem:[%s603] sm:$0x1]
        %v656 = vperm.slane %v654, 0
        %v662 = vunpack.c.l.b16 %v650
        %v663 = vunpack.c.l.b16 %v651
        %v664 = vunpack.c.l.b16 %v652
        %v665 = vunpack.c.l.b16 %v653
        %v666 = vpack.c.b16 %v663, %v662
        %v667 = vpack.c.b16 %v665, %v664
        %vm670 = vcmask 261120
        %v672 = vsel %vm670, %v649, 0
        %674 = vmatpush.bf16.msra.mxu0 0
        %675 = vmatpush.bf16.msra.mxu0 0
        %676 = vmatpush.bf16.msra.mxu0 0
        %677 = vmatpush.bf16.msra.mxu0 0
        %678 = vmatpush.bf16.msra.mxu0 0
        %679 = vmatpush.bf16.msra.mxu0 0
        %680 = vmatpush.bf16.msra.mxu0 %v667
        %681 = vmatpush.bf16.msra.mxu0 %v666
        %682 = vmatmul.bf16.gmra.mxu0 %v672
        %v683 = vpop.f32.mrf.mxu0
        %v684 = vadd.f32 %v656, %v683
        %v685 = vpop.f32.mrf.mxu0
        %686 = vdwg.mxu0
        %v687 = vpack.c.bf16 %v684, %v684
        %v689 = vunpack.c.l.b16 %v687
        %v690 = vpack.c.b16 %v689, %v689
        %691 = vrot.lane.b32.xlu0 %v690, 96
        %v692 = vpop.permute.xlu0 %691
        %vm693 = vcmask 64512
        %v695 = vsel %vm693, %v687, 0
        %v698 = vsel %vm693, %v692, 0
        %700 = vmatpush.bf16.xpose.msra.mxu0 0
        %701 = vmatpush.bf16.xpose.msra.mxu0 0
        %702 = vmatpush.bf16.xpose.msra.mxu0 0
        %703 = vmatpush.bf16.xpose.msra.mxu0 0
        %704 = vmatpush.bf16.xpose.msra.mxu0 0
        %705 = vmatpush.bf16.xpose.msra.mxu0 0
        %706 = vmatpush.bf16.xpose.msra.mxu0 0
        %707 = vmatpush.bf16.xpose.msra.mxu0 %v698
        %708 = vmatmul.bf16.gmra.mxu0 %v695
        %v709 = vpop.f32.mrf.mxu0
        %v710 = vadd.f32 0.0, %v709
        %v711 = vpop.f32.mrf.mxu0
        %712 = vdwg.mxu0
        %v713 = vsel %vm693, %v710, -inf
        %714 = vmax.xlane.f32.xlu0 %v713
        %v715 = vpop.xlane.xlu0 %714
        %v716 = vsub.f32 %v710, %v715
        %v717 = vmul.f32 %v716, 1.442695
        %v718 = vpow.pop %v717
        %v719 = vsel %vm693, %v718, 0.0
        %720 = vadd.xlane.f32.xlu0 %v719
        %v721 = vpop.xlane.xlu0 %720
        %v722 = vrcp.pop %v721
        %v723 = vmul.f32 %v718, %v722
        %v724 = vpack.c.bf16 %v723, %v723
        %725 = vrot.lane.b32.xlu0 %v690, 64
        %v726 = vpop.permute.xlu0 %725
        %v728 = vsel %vm693, %v724, 0
        %vm730 = vcmask 1043456
        %v732 = vsel %vm730, %v726, 0
        %734 = vmatpush.bf16.msra.mxu0 0
        %735 = vmatpush.bf16.msra.mxu0 0
        %736 = vmatpush.bf16.msra.mxu0 0
        %737 = vmatpush.bf16.msra.mxu0 0
        %738 = vmatpush.bf16.msra.mxu0 0
        %739 = vmatpush.bf16.msra.mxu0 0
        %740 = vmatpush.bf16.msra.mxu0 0
        %741 = vmatpush.bf16.msra.mxu0 %v732
        %742 = vmatmul.bf16.gmra.mxu0 %v728
        %v743 = vpop.f32.mrf.mxu0
        %v744 = vadd.f32 0.0, %v743
        %v745 = vpop.f32.mrf.mxu0
        %746 = vdwg.mxu0
        %v747 = vpack.c.bf16 %v744, %v744
        %748 = vrot.lane.b32.xlu0 %v690, 120
        %v749 = vpop.permute.xlu0 %748
        %750 = vrot.lane.b32.xlu0 %v690, 88
        %v751 = vpop.permute.xlu0 %750
        %v753 = vsel %vm693, %v749, 0
        %v756 = vsel %vm693, %v751, 0
        %758 = vmatpush.bf16.xpose.msra.mxu0 0
        %759 = vmatpush.bf16.xpose.msra.mxu0 0
        %760 = vmatpush.bf16.xpose.msra.mxu0 0
        %761 = vmatpush.bf16.xpose.msra.mxu0 0
        %762 = vmatpush.bf16.xpose.msra.mxu0 0
        %763 = vmatpush.bf16.xpose.msra.mxu0 0
        %764 = vmatpush.bf16.xpose.msra.mxu0 0
        %765 = vmatpush.bf16.xpose.msra.mxu0 %v756
        %766 = vmatmul.bf16.gmra.mxu0 %v753
        %v767 = vpop.f32.mrf.mxu0
        %v768 = vadd.f32 0.0, %v767
        %v769 = vpop.f32.mrf.mxu0
        %770 = vdwg.mxu0
        %v771 = vsel %vm693, %v768, -inf
        %772 = vmax.xlane.f32.xlu0 %v771
        %v773 = vpop.xlane.xlu0 %772
        %v774 = vsub.f32 %v768, %v773
        %v775 = vmul.f32 %v774, 1.442695
        %v776 = vpow.pop %v775
        %v777 = vsel %vm693, %v776, 0.0
        %778 = vadd.xlane.f32.xlu0 %v777
        %v779 = vpop.xlane.xlu0 %778
        %v780 = vrcp.pop %v779
        %v781 = vmul.f32 %v776, %v780
        %v782 = vpack.c.bf16 %v781, %v781
        %783 = vrot.lane.b32.xlu0 %v690, 56
        %v784 = vpop.permute.xlu0 %783
        %v786 = vsel %vm693, %v782, 0
        %v789 = vsel %vm730, %v784, 0
        %791 = vmatpush.bf16.msra.mxu0 0
        %792 = vmatpush.bf16.msra.mxu0 0
        %793 = vmatpush.bf16.msra.mxu0 0
        %794 = vmatpush.bf16.msra.mxu0 0
        %795 = vmatpush.bf16.msra.mxu0 0
        %796 = vmatpush.bf16.msra.mxu0 0
        %797 = vmatpush.bf16.msra.mxu0 0
        %798 = vmatpush.bf16.msra.mxu0 %v789
        %799 = vmatmul.bf16.gmra.mxu0 %v786
        %v800 = vpop.f32.mrf.mxu0
        %v801 = vadd.f32 0.0, %v800
        %v802 = vpop.f32.mrf.mxu0
        %803 = vdwg.mxu0
        %v804 = vpack.c.bf16 %v801, %v801
        %805 = vrot.lane.b32.xlu0 %v690, 112
        %v806 = vpop.permute.xlu0 %805
        %807 = vrot.lane.b32.xlu0 %v690, 80
        %v808 = vpop.permute.xlu0 %807
        %v810 = vsel %vm693, %v806, 0
        %v813 = vsel %vm693, %v808, 0
        %815 = vmatpush.bf16.xpose.msra.mxu0 0
        %816 = vmatpush.bf16.xpose.msra.mxu0 0
        %817 = vmatpush.bf16.xpose.msra.mxu0 0
        %818 = vmatpush.bf16.xpose.msra.mxu0 0
        %819 = vmatpush.bf16.xpose.msra.mxu0 0
        %820 = vmatpush.bf16.xpose.msra.mxu0 0
        %821 = vmatpush.bf16.xpose.msra.mxu0 0
        %822 = vmatpush.bf16.xpose.msra.mxu0 %v813
        %823 = vmatmul.bf16.gmra.mxu0 %v810
        %v824 = vpop.f32.mrf.mxu0
        %v825 = vadd.f32 0.0, %v824
        %v826 = vpop.f32.mrf.mxu0
        %827 = vdwg.mxu0
        %v828 = vsel %vm693, %v825, -inf
        %829 = vmax.xlane.f32.xlu0 %v828
        %v830 = vpop.xlane.xlu0 %829
        %v831 = vsub.f32 %v825, %v830
        %v832 = vmul.f32 %v831, 1.442695
        %v833 = vpow.pop %v832
        %v834 = vsel %vm693, %v833, 0.0
        %835 = vadd.xlane.f32.xlu0 %v834
        %v836 = vpop.xlane.xlu0 %835
        %v837 = vrcp.pop %v836
        %v838 = vmul.f32 %v833, %v837
        %v839 = vpack.c.bf16 %v838, %v838
        %840 = vrot.lane.b32.xlu0 %v690, 48
        %v841 = vpop.permute.xlu0 %840
        %v843 = vsel %vm693, %v839, 0
        %v846 = vsel %vm730, %v841, 0
        %848 = vmatpush.bf16.msra.mxu0 0
        %849 = vmatpush.bf16.msra.mxu0 0
        %850 = vmatpush.bf16.msra.mxu0 0
        %851 = vmatpush.bf16.msra.mxu0 0
        %852 = vmatpush.bf16.msra.mxu0 0
        %853 = vmatpush.bf16.msra.mxu0 0
        %854 = vmatpush.bf16.msra.mxu0 0
        %855 = vmatpush.bf16.msra.mxu0 %v846
        %856 = vmatmul.bf16.gmra.mxu0 %v843
        %v857 = vpop.f32.mrf.mxu0
        %v858 = vadd.f32 0.0, %v857
        %v859 = vpop.f32.mrf.mxu0
        %860 = vdwg.mxu0
        %v861 = vpack.c.bf16 %v858, %v858
        %862 = vrot.lane.b32.xlu0 %v690, 104
        %v863 = vpop.permute.xlu0 %862
        %864 = vrot.lane.b32.xlu0 %v690, 72
        %v865 = vpop.permute.xlu0 %864
        %v867 = vsel %vm693, %v863, 0
        %v870 = vsel %vm693, %v865, 0
        %872 = vmatpush.bf16.xpose.msra.mxu0 0
        %873 = vmatpush.bf16.xpose.msra.mxu0 0
        %874 = vmatpush.bf16.xpose.msra.mxu0 0
        %875 = vmatpush.bf16.xpose.msra.mxu0 0
        %876 = vmatpush.bf16.xpose.msra.mxu0 0
        %877 = vmatpush.bf16.xpose.msra.mxu0 0
        %878 = vmatpush.bf16.xpose.msra.mxu0 0
        %879 = vmatpush.bf16.xpose.msra.mxu0 %v870
        %880 = vmatmul.bf16.gmra.mxu0 %v867
        %v881 = vpop.f32.mrf.mxu0
        %v882 = vadd.f32 0.0, %v881
        %v883 = vpop.f32.mrf.mxu0
        %884 = vdwg.mxu0
        %v885 = vsel %vm693, %v882, -inf
        %886 = vmax.xlane.f32.xlu0 %v885
        %v887 = vpop.xlane.xlu0 %886
        %v888 = vsub.f32 %v882, %v887
        %v889 = vmul.f32 %v888, 1.442695
        %v890 = vpow.pop %v889
        %v891 = vsel %vm693, %v890, 0.0
        %892 = vadd.xlane.f32.xlu0 %v891
        %v893 = vpop.xlane.xlu0 %892
        %v894 = vrcp.pop %v893
        %v895 = vmul.f32 %v890, %v894
        %v896 = vpack.c.bf16 %v895, %v895
        %897 = vrot.lane.b32.xlu0 %v690, 40
        %v898 = vpop.permute.xlu0 %897
        %v900 = vsel %vm693, %v896, 0
        %v903 = vsel %vm730, %v898, 0
        %905 = vmatpush.bf16.msra.mxu0 0
        %906 = vmatpush.bf16.msra.mxu0 0
        %907 = vmatpush.bf16.msra.mxu0 0
        %908 = vmatpush.bf16.msra.mxu0 0
        %909 = vmatpush.bf16.msra.mxu0 0
        %910 = vmatpush.bf16.msra.mxu0 0
        %911 = vmatpush.bf16.msra.mxu0 0
        %912 = vmatpush.bf16.msra.mxu0 %v903
        %913 = vmatmul.bf16.gmra.mxu0 %v900
        %v914 = vpop.f32.mrf.mxu0
        %v915 = vadd.f32 0.0, %v914
        %v916 = vpop.f32.mrf.mxu0
        %917 = vdwg.mxu0
        %v918 = vpack.c.bf16 %v915, %v915
        %v920 = vunpack.c.l.b16 %v804
        %v921 = vpack.c.b16 %v920, %v920
        %922 = vrot.lane.b32.xlu0 %v921, 8
        %v923 = vpop.permute.xlu0 %922
        %v925 = vunpack.c.l.b16 %v861
        %v926 = vpack.c.b16 %v925, %v925
        %927 = vrot.lane.b32.xlu0 %v926, 16
        %v928 = vpop.permute.xlu0 %927
        %v930 = vunpack.c.l.b16 %v918
        %v931 = vpack.c.b16 %v930, %v930
        %932 = vrot.lane.b32.xlu0 %v931, 24
        %v933 = vpop.permute.xlu0 %932
        %v936 = vsel %vm693, %v747, %v923
        %vm937 = vcmask 130048
        %v939 = vsel %vm937, %v936, %v928
        %vm940 = vcmask 195584
        %v942 = vsel %vm940, %v939, %v933
        %v943 = vld [vmem:[%s608] sm:$0xf]
        %v944 = vld [vmem:[%s608 + $0x4] sm:$0xf]
        %v945 = vld [vmem:[%s608 + $0x8] sm:$0xf]
        %v946 = vld [vmem:[%s608 + $0xc] sm:$0xf]
        %v947 = vld [vmem:[%s611] sm:$0x1]
        %v949 = vperm.slane %v947, 0
        %v955 = vunpack.c.l.b16 %v943
        %v956 = vunpack.c.l.b16 %v944
        %v957 = vunpack.c.l.b16 %v945
        %v958 = vunpack.c.l.b16 %v946
        %v959 = vpack.c.b16 %v956, %v955
        %v960 = vpack.c.b16 %v958, %v957
        %v963 = vsel %vm670, %v942, 0
        %965 = vmatpush.bf16.msra.mxu0 0
        %966 = vmatpush.bf16.msra.mxu0 0
        %967 = vmatpush.bf16.msra.mxu0 0
        %968 = vmatpush.bf16.msra.mxu0 0
        %969 = vmatpush.bf16.msra.mxu0 0
        %970 = vmatpush.bf16.msra.mxu0 0
        %971 = vmatpush.bf16.msra.mxu0 %v960
        %972 = vmatpush.bf16.msra.mxu0 %v959
        %973 = vmatmul.bf16.gmra.mxu0 %v963
        %v974 = vpop.f32.mrf.mxu0
        %v975 = vadd.f32 %v949, %v974
        %v976 = vpop.f32.mrf.mxu0
        %977 = vdwg.mxu0
        %v978 = vadd.f32 %v975, %v648
        %v979 = vsel %vm670, %v978, 0.0
        %980 = vadd.xlane.f32.xlu0 %v979
        %v981 = vpop.xlane.xlu0 %980
        %v982 = vrcp.pop 32.0
        %v983 = vmul.f32 32.0, %v982
        %v984 = vsub.f32 1.0, %v983
        %v985 = vmul.f32 %v982, %v984
        %v986 = vadd.f32 %v982, %v985
        %vm987 = vweird.f32 %v982
        %v988 = vsel %vm987, %v982, %v986
        %v989 = vmul.f32 %v981, %v988
        %v990 = vmul.f32 %v978, %v978
        %v991 = vsel %vm670, %v990, 0.0
        %992 = vadd.xlane.f32.xlu0 %v991
        %v993 = vpop.xlane.xlu0 %992
        %v994 = vmul.f32 %v993, %v988
        %v995 = vmul.f32 %v989, %v989
        %v996 = vsub.f32 %v994, %v995
        %v997 = vsub.f32 %v978, %v989
        %v998 = vadd.f32 %v996, 1e-05
        %v999 = vrsqrt.pop %v998
        %v1000 = vmul.f32 %v999, %v998
        %v1001 = vmul.f32 %v1000, %v999
        %v1002 = vmul.f32 0.5, %v1001
        %v1003 = vsub.f32 1.5, %v1002
        %v1004 = vmul.f32 %v999, %v1003
        %vm1005 = vweird.f32 %v998
        %vm1006 = vweird.f32 %v999
        %vm1007 = vmor %vm1005, %vm1006
        %v1008 = vsel %vm1007, %v999, %v1004
        %v1009 = vmul.f32 %v997, %v1008
        %v1010 = vld [vmem:[%s614] sm:$0x1]
        %v1012 = vperm.slane %v1010, 0
        %v1014 = vmul.f32 %v1009, %v1012
        %v1015 = vld [vmem:[%s617] sm:$0x1]
        %v1017 = vperm.slane %v1015, 0
        %v1019 = vadd.f32 %v1014, %v1017
        %v1020 = vpack.c.bf16 %v1019, %v1019
        %v1021 = vld [vmem:[%s622] sm:$0xf]
        %v1022 = vld [vmem:[%s622 + $0x4] sm:$0xf]
        %v1023 = vld [vmem:[%s622 + $0x8] sm:$0xf]
        %v1024 = vld [vmem:[%s622 + $0xc] sm:$0xf]
        %v1025 = vld [vmem:[%s625] sm:$0x1]
        %v1027 = vperm.slane %v1025, 0
        %v1033 = vunpack.c.l.b16 %v1021
        %v1034 = vunpack.c.l.b16 %v1022
        %v1035 = vunpack.c.l.b16 %v1023
        %v1036 = vunpack.c.l.b16 %v1024
        %v1037 = vpack.c.b16 %v1034, %v1033
        %v1038 = vpack.c.b16 %v1036, %v1035
        %v1042 = vsel %vm670, %v1020, 0
        %1044 = vmatpush.bf16.msra.mxu0 0
        %1045 = vmatpush.bf16.msra.mxu0 0
        %1046 = vmatpush.bf16.msra.mxu0 0
        %1047 = vmatpush.bf16.msra.mxu0 0
        %1048 = vmatpush.bf16.msra.mxu0 0
        %1049 = vmatpush.bf16.msra.mxu0 0
        %1050 = vmatpush.bf16.msra.mxu0 %v1038
        %1051 = vmatpush.bf16.msra.mxu0 %v1037
        %1052 = vmatmul.bf16.gmra.mxu0 %v1042
        %v1053 = vpop.f32.mrf.mxu0
        %v1054 = vadd.f32 %v1027, %v1053
        %v1055 = vpop.f32.mrf.mxu0
        %1056 = vdwg.mxu0
        %v1057 = vmax.f32 %v1054, 0.0
        %v1058 = vpack.c.bf16 %v1057, %v1057
        %v1059 = vld [vmem:[%s630] sm:$0xf]
        %v1060 = vld [vmem:[%s630 + $0x4] sm:$0xf]
        %v1061 = vld [vmem:[%s630 + $0x8] sm:$0xf]
        %v1062 = vld [vmem:[%s630 + $0xc] sm:$0xf]
        %v1063 = vld [vmem:[%s630 + $0x10] sm:$0xf]
        %v1064 = vld [vmem:[%s630 + $0x14] sm:$0xf]
        %v1065 = vld [vmem:[%s630 + $0x18] sm:$0xf]
        %v1066 = vld [vmem:[%s630 + $0x1c] sm:$0xf]
        %v1067 = vld [vmem:[%s630 + $0x20] sm:$0xf]
        %v1068 = vld [vmem:[%s630 + $0x24] sm:$0xf]
        %v1069 = vld [vmem:[%s630 + $0x28] sm:$0xf]
        %v1070 = vld [vmem:[%s630 + $0x2c] sm:$0xf]
        %v1071 = vld [vmem:[%s630 + $0x30] sm:$0xf]
        %v1072 = vld [vmem:[%s630 + $0x34] sm:$0xf]
        %v1073 = vld [vmem:[%s630 + $0x38] sm:$0xf]
        %v1074 = vld [vmem:[%s630 + $0x3c] sm:$0xf]
        %v1075 = vld [vmem:[%s633] sm:$0x1]
        %v1077 = vperm.slane %v1075, 0
        %v1095 = vunpack.c.l.b16 %v1059
        %v1096 = vunpack.c.l.b16 %v1060
        %v1097 = vunpack.c.l.b16 %v1061
        %v1098 = vunpack.c.l.b16 %v1062
        %v1099 = vunpack.c.l.b16 %v1063
        %v1100 = vunpack.c.l.b16 %v1064
        %v1101 = vunpack.c.l.b16 %v1065
        %v1102 = vunpack.c.l.b16 %v1066
        %v1103 = vunpack.c.l.b16 %v1067
        %v1104 = vunpack.c.l.b16 %v1068
        %v1105 = vunpack.c.l.b16 %v1069
        %v1106 = vunpack.c.l.b16 %v1070
        %v1107 = vunpack.c.l.b16 %v1071
        %v1108 = vunpack.c.l.b16 %v1072
        %v1109 = vunpack.c.l.b16 %v1073
        %v1110 = vunpack.c.l.b16 %v1074
        %v1111 = vpack.c.b16 %v1096, %v1095
        %v1112 = vpack.c.b16 %v1098, %v1097
        %v1113 = vpack.c.b16 %v1100, %v1099
        %v1114 = vpack.c.b16 %v1102, %v1101
        %v1115 = vpack.c.b16 %v1104, %v1103
        %v1116 = vpack.c.b16 %v1106, %v1105
        %v1117 = vpack.c.b16 %v1108, %v1107
        %v1118 = vpack.c.b16 %v1110, %v1109
        %1127 = vmatpush.bf16.msra.mxu0 %v1118
        %1128 = vmatpush.bf16.msra.mxu0 %v1117
        %1129 = vmatpush.bf16.msra.mxu0 %v1116
        %1130 = vmatpush.bf16.msra.mxu0 %v1115
        %1131 = vmatpush.bf16.msra.mxu0 %v1114
        %1132 = vmatpush.bf16.msra.mxu0 %v1113
        %1133 = vmatpush.bf16.msra.mxu0 %v1112
        %1134 = vmatpush.bf16.msra.mxu0 %v1111
        %1135 = vmatmul.bf16.gmra.mxu0 %v1058
        %v1136 = vpop.f32.mrf.mxu0
        %v1137 = vadd.f32 %v1077, %v1136
        %v1138 = vpop.f32.mrf.mxu0
        %1139 = vdwg.mxu0
        %v1140 = vadd.f32 %v1137, %v1019
        %v1141 = vsel %vm670, %v1140, 0.0
        %1142 = vadd.xlane.f32.xlu0 %v1141
        %v1143 = vpop.xlane.xlu0 %1142
        %v1144 = vmul.f32 %v1143, %v988
        %v1145 = vmul.f32 %v1140, %v1140
        %v1146 = vsel %vm670, %v1145, 0.0
        %1147 = vadd.xlane.f32.xlu0 %v1146
        %v1148 = vpop.xlane.xlu0 %1147
        %v1149 = vmul.f32 %v1148, %v988
        %v1150 = vmul.f32 %v1144, %v1144
        %v1151 = vsub.f32 %v1149, %v1150
        %v1152 = vsub.f32 %v1140, %v1144
        %v1153 = vadd.f32 %v1151, 1e-05
        %v1154 = vrsqrt.pop %v1153
        %v1155 = vmul.f32 %v1154, %v1153
        %v1156 = vmul.f32 %v1155, %v1154
        %v1157 = vmul.f32 0.5, %v1156
        %v1158 = vsub.f32 1.5, %v1157
        %v1159 = vmul.f32 %v1154, %v1158
        %vm1160 = vweird.f32 %v1153
        %vm1161 = vweird.f32 %v1154
        %vm1162 = vmor %vm1160, %vm1161
        %v1163 = vsel %vm1162, %v1154, %v1159
        %v1164 = vmul.f32 %v1152, %v1163
        %v1165 = vld [vmem:[%s636] sm:$0x1]
        %v1167 = vperm.slane %v1165, 0
        %v1169 = vmul.f32 %v1164, %v1167
        %v1170 = vld [vmem:[%s639] sm:$0x1]
        %v1172 = vperm.slane %v1170, 0
        %v1174 = vadd.f32 %v1169, %v1172
        %1175 = vst.msk [vmem:[#allocation2] sm:$0xff] %vm670, %v1174
        %p1176 = scmp.eq.s32.totalorder %s32, 1
        // Predicated region
        $region77: #{transformer_encoder.1} parent=71 // pred_check
          %p1177 = pneg %p1176
        $region78: #{transformer_encoder.1} parent=71 // pred_check_branch
          %1179 = sbr.rel (%p1177) target = $region80
        $region79: #{transformer_encoder.1} parent=71 // pred_region
          %1180 = vst.msk [vmem:[%s591] sm:$0xff] %vm670, %v1174
        $region80: #{transformer_encoder.1} parent=71 // pred_fallthru
          _
        %s1181 = sand.u32 %s385, 1
        %s1182 = scalar_lea.sflag [#allocation4], %s1181
        %s1183 = sand.u32 %s385, 1
        %s1184 = smul.addr %s1183, 8
        %s1185 = scalar_lea.vmem [#allocation3], %s1184
        // Predicated region
        $region81: #{transformer_encoder.1} parent=71 // pred_check
          %p1186 = pneg %p395
        $region82: #{transformer_encoder.1} parent=71 // pred_check_branch
          %1188 = sbr.rel (%p1186) target = $region84
        $region83: #{transformer_encoder.1} parent=71 // pred_region
          %1190 = vsyncadd %s1182, 0
          %s1191 = smul.addr %s31, 8
          %s1192 = scalar_lea.hbm %s13, %s1191
          %s1194 = sshll.u32 %s1185, 4
          %s1195 = int_to_ptr.vmem [resolvable:$true] %s1194
          %s1196 = sshll.u32 %s1192, 4
          %s1197 = int_to_ptr.hbm [resolvable:$true] %s1196
          %1199 = dma.vmem_to_hbm [thread:$0]  %s1195, 128, %s1197, %s1182
        $region84: #{transformer_encoder.1} parent=71 // pred_fallthru
          _
      $region72: #{transformer_encoder.1} parent=5 // pred_fallthru
        _
      %p1200 = scmp.le.s32.totalorder 2, %s22
      // Predicated region
      $region85: #{transformer_encoder.1} parent=5 // pred_check
        %p1201 = pneg %p1200
      $region86: #{transformer_encoder.1} parent=5 // pred_check_branch
        %1203 = sbr.rel (%p1201) target = $region88
      $region87: #{transformer_encoder.1} parent=5 // pred_region
        %s1204 = ssub.s32 %s22, 2
        // Predicated region
        $region89: #{transformer_encoder.1} parent=87 // pred_check
          %p1205 = pneg %p401
        $region90: #{transformer_encoder.1} parent=87 // pred_check_branch
          %1207 = sbr.rel (%p1205) target = $region92
        $region91: #{transformer_encoder.1} parent=87 // pred_region
          %s1208 = sand.u32 %s386, 1
          %s1209 = scalar_lea.sflag [#allocation4], %s1208
          %s1210 = sand.u32 %s386, 1
          %s1211 = smul.addr %s1210, 8
          %s1212 = scalar_lea.vmem [#allocation3], %s1211
          %1214 = dma.done %s1209, 128
        $region92: #{transformer_encoder.1} parent=87 // pred_fallthru
          _
      $region88: #{transformer_encoder.1} parent=5 // pred_fallthru
        _
    $region6: #{transformer_encoder.1} parent=1 // loop_footer
      %s26 = sadd.s32 1, %s22
    $region7: #{transformer_encoder.1} parent=1 // loop_footer_branch
      %21 = sbr.rel target = $region3
    $region8: #{transformer_encoder.1} parent=1 // loop_exit
      _
    %1215 = vsyncpa [#allocation4], 1
    %s1216 = scalar_lea.sflag [#allocation4], 1
    %1217 = vsyncpa %s1216, 1

</llo_original>
